<compile_context>
chip_gen: v7x
topology: tpu7x:2x2x1
jax: 0.10.0
libtpu: 0.0.40
codegen_flags: <defaults>
</compile_context>

<pallas_src>
import functools

import jax
import jax.numpy as jnp
from jax.experimental import pallas as pl
from jax.experimental.pallas import tpu as pltpu


def _round_up(x, m):
    return ((x + m - 1) // m) * m


def make_lstm_kernel(n_layers, hidden, seq_len, batch_pad, ln_eps=1e-5):
    L, H, T, Bp = n_layers, hidden, seq_len, batch_pad
    G = 4 * H  # dense gate stripe (128 lanes for H=32)

    def cell(z, c_prev):
        # z columns packed as [i, f, o, 2*g_preact] (g pre-scaled by 2 at pack
        # time), so one tanh over the full stripe yields all four gates:
        #   sigma(x) = 0.5*tanh(x/2) + 0.5 ;  tanh(g) = tanh(0.5 * 2g)
        t = jnp.tanh(0.5 * z)                      # EUP pass #1 (all gates)
        i_g = 0.5 * t[:, 0 * H:1 * H] + 0.5
        f_g = 0.5 * t[:, 1 * H:2 * H] + 0.5
        o_g = 0.5 * t[:, 2 * H:3 * H] + 0.5
        g_g = t[:, 3 * H:4 * H]                    # exactly tanh(z_g)
        c_new = f_g * c_prev + i_g * g_g
        h_new = o_g * jnp.tanh(c_new)              # EUP pass #2
        return h_new, c_new

    def kernel(x_ref, gamma_ref, beta_ref, wih0_ref, whh0_ref, b0_ref, *rest):
        # rest = [wih_l, whh_l, b_l for l in 1..L-1] + [wlin, blin, out_ref]
        deep = []
        idx = 0
        for _ in range(L - 1):
            deep.append((rest[idx], rest[idx + 1], rest[idx + 2]))
            idx += 3
        wlin_ref, blin_ref = rest[idx], rest[idx + 1]
        out_ref = rest[idx + 2]

        # ---- Hoisted: LayerNorm + layer-0 input projection for ALL timesteps ----
        # x_ref: (T*Bp, D) f32, time-major rows (row = t*Bp + b)
        x = x_ref[...]
        mu = jnp.mean(x, axis=-1, keepdims=True)
        var = jnp.mean(jnp.square(x - mu), axis=-1, keepdims=True)
        xn = (x - mu) * jax.lax.rsqrt(var + ln_eps) * gamma_ref[...] + beta_ref[...]
        xproj = jnp.dot(xn.astype(jnp.bfloat16), wih0_ref[...],
                        preferred_element_type=jnp.float32) + b0_ref[...]  # (T*Bp, G)

        # deep-layer biases: broadcast once (1 vreg each), not per step
        b_deep = [jnp.broadcast_to(b_ref[...], (Bp, G)) for (_, _, b_ref) in deep]

        h_bf = [jnp.zeros((Bp, H), jnp.bfloat16) for _ in range(L)]
        c = [jnp.zeros((Bp, H), jnp.float32) for _ in range(L)]

        # ---- Fully unrolled recurrence over the (static) time axis ----
        for step in range(T):
            xz = xproj[step * Bp:(step + 1) * Bp, :]              # (Bp, G) value slice
            z0 = xz + jnp.dot(h_bf[0], whh0_ref[...],             # weights read per site
                              preferred_element_type=jnp.float32)
            h0, c[0] = cell(z0, c[0])
            h_bf[0] = h0.astype(jnp.bfloat16)                     # cast once, reused twice
            for l in range(1, L):
                wih_ref, whh_ref, _ = deep[l - 1]
                zl = (jnp.dot(h_bf[l - 1], wih_ref[...],
                              preferred_element_type=jnp.float32)
                      + jnp.dot(h_bf[l], whh_ref[...],
                                preferred_element_type=jnp.float32)
                      + b_deep[l - 1])
                hl, c[l] = cell(zl, c[l])
                h_bf[l] = hl.astype(jnp.bfloat16)

        # ---- last time step of top layer -> ReLU -> Linear ----
        act = jnp.maximum(h_bf[L - 1], 0)                         # ReLU (bf16)
        y = jnp.dot(act, wlin_ref[...],
                    preferred_element_type=jnp.float32) + blin_ref[...]
        out_ref[...] = y                                          # lane-dense (Bp, Np) store

    return kernel


def _pack_params(params, n_layers, H, target_pad):
    """Transpose + reorder gates to [i, f, o, g] and pre-scale g by 2."""
    def pack_gates(w_t):
        # w_t: (rows, 4H), columns in PyTorch order [i | f | g | o]
        rows = w_t.shape[0]
        w4 = w_t.reshape(rows, 4, H)
        i, f, g, o = w4[:, 0], w4[:, 1], w4[:, 2], w4[:, 3]
        return jnp.concatenate([i, f, o, 2.0 * g], axis=-1)      # (rows, 4H)

    packed = []
    # layer 0: input projection hoisted out of the time loop
    packed.append(pack_gates(params["wih0"].T).astype(jnp.bfloat16))          # (D, 4H)
    packed.append(pack_gates(params["whh0"].T).astype(jnp.bfloat16))          # (H, 4H)
    packed.append(pack_gates((params["bih0"] + params["bhh0"])
                             .reshape(1, 4 * H)).astype(jnp.float32))          # (1, 4H)
    # deeper layers: separate W_ih / W_hh (two accumulating dots, no concat)
    for l in range(1, n_layers):
        packed.append(pack_gates(params[f"wih{l}"].T).astype(jnp.bfloat16))   # (H, 4H)
        packed.append(pack_gates(params[f"whh{l}"].T).astype(jnp.bfloat16))   # (H, 4H)
        packed.append(pack_gates((params[f"bih{l}"] + params[f"bhh{l}"])
                                 .reshape(1, 4 * H)).astype(jnp.float32))      # (1, 4H)
    # final linear, output columns padded to a full 128-lane stripe
    t_num = params["lin_w"].shape[0]
    wlin = jnp.zeros((H, target_pad), jnp.float32).at[:, :t_num].set(params["lin_w"].T)
    blin = jnp.zeros((1, target_pad), jnp.float32).at[:, :t_num].set(params["lin_b"])
    packed += [wlin.astype(jnp.bfloat16), blin]
    return packed


@functools.partial(jax.jit, static_argnames=("n_layers", "n_hidden"))
def lstm_forward(x, params, *, n_layers, n_hidden):
    """x: (B, T, D) float32 (batch_first, matching the PyTorch module)."""
    B, T, D = x.shape
    H = n_hidden
    G = 4 * H
    Bp = _round_up(max(B, 8), 8)                     # full sublane tile
    target_num = params["lin_w"].shape[0]
    Np = _round_up(max(target_num, 128), 128)        # lane-dense output stripe

    # pad batch, move time to the leading axis, flatten to time-major rows
    x_p = jnp.pad(x, ((0, Bp - B), (0, 0), (0, 0)))
    x_2d = jnp.transpose(x_p, (1, 0, 2)).reshape(T * Bp, D)   # row = t*Bp + b

    gamma = params["ln_w"].reshape(1, D).astype(jnp.float32)
    beta = params["ln_b"].reshape(1, D).astype(jnp.float32)

    inputs = [x_2d, gamma, beta] + _pack_params(params, n_layers, H, Np)

    kernel = make_lstm_kernel(n_layers, H, T, Bp)

    in_bytes = sum(int(a.size) * a.dtype.itemsize for a in inputs)
    out_bytes = Bp * Np * 4
    flops = (2 * T * Bp * D * G                           # layer-0 input projection
             + 2 * T * Bp * H * G                         # layer-0 recurrence
             + 2 * T * (n_layers - 1) * Bp * 2 * H * G    # deeper layers (two dots)
             + 2 * Bp * H * Np)                           # final linear
    transcendentals = T * n_layers * Bp * (G + H)         # 2 tanh per cell
    # footprint is tiny; cap well under v7x's 64 MiB/TC VMEM
    vmem_limit = int(min(48 * 1024 * 1024,
                         max(8 * 1024 * 1024, 8 * (in_bytes + out_bytes))))

    y = pl.pallas_call(
        kernel,
        out_shape=jax.ShapeDtypeStruct((Bp, Np), jnp.float32),
        in_specs=[pl.BlockSpec(memory_space=pltpu.MemorySpace.VMEM)] * len(inputs),
        out_specs=pl.BlockSpec(memory_space=pltpu.MemorySpace.VMEM),
        compiler_params=pltpu.CompilerParams(vmem_limit_bytes=vmem_limit),
        cost_estimate=pl.CostEstimate(flops=flops,
                                      transcendentals=transcendentals,
                                      bytes_accessed=in_bytes + out_bytes),
    )(*inputs)

    return y[:B, :target_num]  # drop batch + output-lane padding


def init_params(key, input_num, n_hidden, n_layers, target_num):
    """PyTorch-layout parameters, uniform(-1/sqrt(H), 1/sqrt(H)) like nn.LSTM/Linear."""
    params = {}
    k = 1.0 / jnp.sqrt(jnp.float32(n_hidden))
    keys = jax.random.split(key, 4 * n_layers + 2)
    ki = 0

    # LayerNorm defaults: weight=1, bias=0
    params["ln_w"] = jnp.ones((input_num,), jnp.float32)
    params["ln_b"] = jnp.zeros((input_num,), jnp.float32)

    for l in range(n_layers):
        in_dim = input_num if l == 0 else n_hidden
        params[f"wih{l}"] = jax.random.uniform(
            keys[ki], (4 * n_hidden, in_dim), jnp.float32, -k, k); ki += 1
        params[f"whh{l}"] = jax.random.uniform(
            keys[ki], (4 * n_hidden, n_hidden), jnp.float32, -k, k); ki += 1
        params[f"bih{l}"] = jax.random.uniform(
            keys[ki], (4 * n_hidden,), jnp.float32, -k, k); ki += 1
        params[f"bhh{l}"] = jax.random.uniform(
            keys[ki], (4 * n_hidden,), jnp.float32, -k, k); ki += 1

    params["lin_w"] = jax.random.uniform(
        keys[ki], (target_num, n_hidden), jnp.float32, -k, k); ki += 1
    params["lin_b"] = jax.random.uniform(
        keys[ki], (target_num,), jnp.float32, -k, k); ki += 1
    return params


if __name__ == "__main__":
    batch = 2
    seq_len = 8
    input_num = 32     # feature dim normalized by LayerNorm and fed to the LSTM
    n_hidden = 32
    n_layers = 2
    target_num = 4

    key = jax.random.PRNGKey(0)
    k_x, k_p = jax.random.split(key)

    x = jax.random.normal(k_x, (batch, seq_len, input_num), jnp.float32)
    params = init_params(k_p, input_num, n_hidden, n_layers, target_num)

    y = lstm_forward(x, params, n_layers=n_layers, n_hidden=n_hidden)
    jax.block_until_ready(y)

    assert y.shape == (batch, target_num)
    assert bool(jnp.all(jnp.isfinite(y)))
    print("KERNEL_OK")
</pallas_src>

<mosaic_0001>
module attributes {stable_mosaic.version = 11 : i64} {
  func.func @kernel(%arg0: memref<64x32xf32, #tpu.memory_space<vmem>>, %arg1: memref<1x32xf32, #tpu.memory_space<vmem>>, %arg2: memref<1x32xf32, #tpu.memory_space<vmem>>, %arg3: memref<32x128xbf16, #tpu.memory_space<vmem>>, %arg4: memref<32x128xbf16, #tpu.memory_space<vmem>>, %arg5: memref<1x128xf32, #tpu.memory_space<vmem>>, %arg6: memref<32x128xbf16, #tpu.memory_space<vmem>>, %arg7: memref<32x128xbf16, #tpu.memory_space<vmem>>, %arg8: memref<1x128xf32, #tpu.memory_space<vmem>>, %arg9: memref<32x128xbf16, #tpu.memory_space<vmem>>, %arg10: memref<1x128xf32, #tpu.memory_space<vmem>>, %arg11: memref<8x128xf32, #tpu.memory_space<vmem>>) attributes {dimension_semantics = [], scalar_prefetch = 0 : i64, scratch_operands = 0 : i64, tpu.core_type = #tpu.core_type<tc>} {
    %c0 = arith.constant 0 : index
    %c0_0 = arith.constant 0 : index
    %0 = vector.load %arg0[%c0, %c0_0] : memref<64x32xf32, #tpu.memory_space<vmem>>, vector<64x32xf32>
    %cst = arith.constant dense<0.000000e+00> : vector<64xf32>
    %1 = vector.multi_reduction <add>, %0, %cst [1] : vector<64x32xf32> to vector<64xf32>
    %2 = vector.shape_cast %1 : vector<64xf32> to vector<64x1xf32>
    %cst_1 = arith.constant 3.200000e+01 : f32
    %3 = vector.broadcast %cst_1 : f32 to vector<64x1xf32>
    %4 = arith.divf %2, %3 : vector<64x1xf32>
    %5 = vector.broadcast %4 : vector<64x1xf32> to vector<64x32xf32>
    %6 = arith.subf %0, %5 : vector<64x32xf32>
    %7 = arith.mulf %6, %6 : vector<64x32xf32>
    %cst_2 = arith.constant dense<0.000000e+00> : vector<64xf32>
    %8 = vector.multi_reduction <add>, %7, %cst_2 [1] : vector<64x32xf32> to vector<64xf32>
    %9 = vector.shape_cast %8 : vector<64xf32> to vector<64x1xf32>
    %cst_3 = arith.constant 3.200000e+01 : f32
    %10 = vector.broadcast %cst_3 : f32 to vector<64x1xf32>
    %11 = arith.divf %9, %10 : vector<64x1xf32>
    %12 = vector.broadcast %4 : vector<64x1xf32> to vector<64x32xf32>
    %13 = arith.subf %0, %12 : vector<64x32xf32>
    %cst_4 = arith.constant 9.99999974E-6 : f32
    %14 = vector.broadcast %cst_4 : f32 to vector<64x1xf32>
    %15 = arith.addf %11, %14 : vector<64x1xf32>
    %16 = math.rsqrt %15 : vector<64x1xf32>
    %17 = vector.broadcast %16 : vector<64x1xf32> to vector<64x32xf32>
    %18 = arith.mulf %13, %17 : vector<64x32xf32>
    %c0_5 = arith.constant 0 : index
    %c0_6 = arith.constant 0 : index
    %19 = vector.load %arg1[%c0_5, %c0_6] : memref<1x32xf32, #tpu.memory_space<vmem>>, vector<1x32xf32>
    %20 = vector.broadcast %19 : vector<1x32xf32> to vector<64x32xf32>
    %21 = arith.mulf %18, %20 : vector<64x32xf32>
    %c0_7 = arith.constant 0 : index
    %c0_8 = arith.constant 0 : index
    %22 = vector.load %arg2[%c0_7, %c0_8] : memref<1x32xf32, #tpu.memory_space<vmem>>, vector<1x32xf32>
    %23 = vector.broadcast %22 : vector<1x32xf32> to vector<64x32xf32>
    %24 = arith.addf %21, %23 : vector<64x32xf32>
    %25 = arith.truncf %24 : vector<64x32xf32> to vector<64x32xbf16>
    %c0_9 = arith.constant 0 : index
    %c0_10 = arith.constant 0 : index
    %26 = vector.load %arg3[%c0_9, %c0_10] : memref<32x128xbf16, #tpu.memory_space<vmem>>, vector<32x128xbf16>
    %cst_11 = arith.constant dense<0.000000e+00> : vector<64x128xf32>
    %27 = tpu.matmul %25, %26, %cst_11 {dimension_numbers = #tpu.dot_dimension_numbers<[1], [0], [0], [1], [0, 0, 1, 1], [], []>} : vector<64x32xbf16>, vector<32x128xbf16>, vector<64x128xf32> -> vector<64x128xf32>
    %c0_12 = arith.constant 0 : index
    %c0_13 = arith.constant 0 : index
    %28 = vector.load %arg5[%c0_12, %c0_13] : memref<1x128xf32, #tpu.memory_space<vmem>>, vector<1x128xf32>
    %29 = vector.broadcast %28 : vector<1x128xf32> to vector<64x128xf32>
    %30 = arith.addf %27, %29 : vector<64x128xf32>
    %c0_14 = arith.constant 0 : index
    %c0_15 = arith.constant 0 : index
    %31 = vector.load %arg8[%c0_14, %c0_15] : memref<1x128xf32, #tpu.memory_space<vmem>>, vector<1x128xf32>
    %32 = vector.shape_cast %31 : vector<1x128xf32> to vector<1x128xf32>
    %33 = vector.broadcast %32 : vector<1x128xf32> to vector<8x128xf32>
    %cst_16 = arith.constant 0.000000e+00 : bf16
    %34 = vector.broadcast %cst_16 : bf16 to vector<8x32xbf16>
    %cst_17 = arith.constant 0.000000e+00 : bf16
    %35 = vector.broadcast %cst_17 : bf16 to vector<8x32xbf16>
    %cst_18 = arith.constant 0.000000e+00 : f32
    %36 = vector.broadcast %cst_18 : f32 to vector<8x32xf32>
    %cst_19 = arith.constant 0.000000e+00 : f32
    %37 = vector.broadcast %cst_19 : f32 to vector<8x32xf32>
    %38 = vector.extract_strided_slice %30 {offsets = [0, 0], sizes = [8, 128], strides = [1, 1]} : vector<64x128xf32> to vector<8x128xf32>
    %c0_20 = arith.constant 0 : index
    %c0_21 = arith.constant 0 : index
    %39 = vector.load %arg4[%c0_20, %c0_21] : memref<32x128xbf16, #tpu.memory_space<vmem>>, vector<32x128xbf16>
    %cst_22 = arith.constant dense<0.000000e+00> : vector<8x128xf32>
    %40 = tpu.matmul %34, %39, %cst_22 {dimension_numbers = #tpu.dot_dimension_numbers<[1], [0], [0], [1], [0, 0, 1, 1], [], []>} : vector<8x32xbf16>, vector<32x128xbf16>, vector<8x128xf32> -> vector<8x128xf32>
    %41 = arith.addf %38, %40 : vector<8x128xf32>
    %cst_23 = arith.constant 5.000000e-01 : f32
    %42 = vector.broadcast %cst_23 : f32 to vector<8x128xf32>
    %43 = arith.mulf %42, %41 : vector<8x128xf32>
    %44 = math.tanh %43 : vector<8x128xf32>
    %45 = vector.extract_strided_slice %44 {offsets = [0, 0], sizes = [8, 32], strides = [1, 1]} : vector<8x128xf32> to vector<8x32xf32>
    %cst_24 = arith.constant 5.000000e-01 : f32
    %46 = vector.broadcast %cst_24 : f32 to vector<8x32xf32>
    %47 = arith.mulf %46, %45 : vector<8x32xf32>
    %cst_25 = arith.constant 5.000000e-01 : f32
    %48 = vector.broadcast %cst_25 : f32 to vector<8x32xf32>
    %49 = arith.addf %47, %48 : vector<8x32xf32>
    %50 = vector.extract_strided_slice %44 {offsets = [0, 32], sizes = [8, 32], strides = [1, 1]} : vector<8x128xf32> to vector<8x32xf32>
    %cst_26 = arith.constant 5.000000e-01 : f32
    %51 = vector.broadcast %cst_26 : f32 to vector<8x32xf32>
    %52 = arith.mulf %51, %50 : vector<8x32xf32>
    %cst_27 = arith.constant 5.000000e-01 : f32
    %53 = vector.broadcast %cst_27 : f32 to vector<8x32xf32>
    %54 = arith.addf %52, %53 : vector<8x32xf32>
    %55 = vector.extract_strided_slice %44 {offsets = [0, 64], sizes = [8, 32], strides = [1, 1]} : vector<8x128xf32> to vector<8x32xf32>
    %cst_28 = arith.constant 5.000000e-01 : f32
    %56 = vector.broadcast %cst_28 : f32 to vector<8x32xf32>
    %57 = arith.mulf %56, %55 : vector<8x32xf32>
    %cst_29 = arith.constant 5.000000e-01 : f32
    %58 = vector.broadcast %cst_29 : f32 to vector<8x32xf32>
    %59 = arith.addf %57, %58 : vector<8x32xf32>
    %60 = vector.extract_strided_slice %44 {offsets = [0, 96], sizes = [8, 32], strides = [1, 1]} : vector<8x128xf32> to vector<8x32xf32>
    %61 = arith.mulf %54, %36 : vector<8x32xf32>
    %62 = arith.mulf %49, %60 : vector<8x32xf32>
    %63 = arith.addf %61, %62 : vector<8x32xf32>
    %64 = math.tanh %63 : vector<8x32xf32>
    %65 = arith.mulf %59, %64 : vector<8x32xf32>
    %66 = arith.truncf %65 : vector<8x32xf32> to vector<8x32xbf16>
    %c0_30 = arith.constant 0 : index
    %c0_31 = arith.constant 0 : index
    %67 = vector.load %arg6[%c0_30, %c0_31] : memref<32x128xbf16, #tpu.memory_space<vmem>>, vector<32x128xbf16>
    %cst_32 = arith.constant dense<0.000000e+00> : vector<8x128xf32>
    %68 = tpu.matmul %66, %67, %cst_32 {dimension_numbers = #tpu.dot_dimension_numbers<[1], [0], [0], [1], [0, 0, 1, 1], [], []>} : vector<8x32xbf16>, vector<32x128xbf16>, vector<8x128xf32> -> vector<8x128xf32>
    %c0_33 = arith.constant 0 : index
    %c0_34 = arith.constant 0 : index
    %69 = vector.load %arg7[%c0_33, %c0_34] : memref<32x128xbf16, #tpu.memory_space<vmem>>, vector<32x128xbf16>
    %cst_35 = arith.constant dense<0.000000e+00> : vector<8x128xf32>
    %70 = tpu.matmul %35, %69, %cst_35 {dimension_numbers = #tpu.dot_dimension_numbers<[1], [0], [0], [1], [0, 0, 1, 1], [], []>} : vector<8x32xbf16>, vector<32x128xbf16>, vector<8x128xf32> -> vector<8x128xf32>
    %71 = arith.addf %68, %70 : vector<8x128xf32>
    %72 = arith.addf %71, %33 : vector<8x128xf32>
    %cst_36 = arith.constant 5.000000e-01 : f32
    %73 = vector.broadcast %cst_36 : f32 to vector<8x128xf32>
    %74 = arith.mulf %73, %72 : vector<8x128xf32>
    %75 = math.tanh %74 : vector<8x128xf32>
    %76 = vector.extract_strided_slice %75 {offsets = [0, 0], sizes = [8, 32], strides = [1, 1]} : vector<8x128xf32> to vector<8x32xf32>
    %cst_37 = arith.constant 5.000000e-01 : f32
    %77 = vector.broadcast %cst_37 : f32 to vector<8x32xf32>
    %78 = arith.mulf %77, %76 : vector<8x32xf32>
    %cst_38 = arith.constant 5.000000e-01 : f32
    %79 = vector.broadcast %cst_38 : f32 to vector<8x32xf32>
    %80 = arith.addf %78, %79 : vector<8x32xf32>
    %81 = vector.extract_strided_slice %75 {offsets = [0, 32], sizes = [8, 32], strides = [1, 1]} : vector<8x128xf32> to vector<8x32xf32>
    %cst_39 = arith.constant 5.000000e-01 : f32
    %82 = vector.broadcast %cst_39 : f32 to vector<8x32xf32>
    %83 = arith.mulf %82, %81 : vector<8x32xf32>
    %cst_40 = arith.constant 5.000000e-01 : f32
    %84 = vector.broadcast %cst_40 : f32 to vector<8x32xf32>
    %85 = arith.addf %83, %84 : vector<8x32xf32>
    %86 = vector.extract_strided_slice %75 {offsets = [0, 64], sizes = [8, 32], strides = [1, 1]} : vector<8x128xf32> to vector<8x32xf32>
    %cst_41 = arith.constant 5.000000e-01 : f32
    %87 = vector.broadcast %cst_41 : f32 to vector<8x32xf32>
    %88 = arith.mulf %87, %86 : vector<8x32xf32>
    %cst_42 = arith.constant 5.000000e-01 : f32
    %89 = vector.broadcast %cst_42 : f32 to vector<8x32xf32>
    %90 = arith.addf %88, %89 : vector<8x32xf32>
    %91 = vector.extract_strided_slice %75 {offsets = [0, 96], sizes = [8, 32], strides = [1, 1]} : vector<8x128xf32> to vector<8x32xf32>
    %92 = arith.mulf %85, %37 : vector<8x32xf32>
    %93 = arith.mulf %80, %91 : vector<8x32xf32>
    %94 = arith.addf %92, %93 : vector<8x32xf32>
    %95 = math.tanh %94 : vector<8x32xf32>
    %96 = arith.mulf %90, %95 : vector<8x32xf32>
    %97 = arith.truncf %96 : vector<8x32xf32> to vector<8x32xbf16>
    %98 = vector.extract_strided_slice %30 {offsets = [8, 0], sizes = [8, 128], strides = [1, 1]} : vector<64x128xf32> to vector<8x128xf32>
    %c0_43 = arith.constant 0 : index
    %c0_44 = arith.constant 0 : index
    %99 = vector.load %arg4[%c0_43, %c0_44] : memref<32x128xbf16, #tpu.memory_space<vmem>>, vector<32x128xbf16>
    %cst_45 = arith.constant dense<0.000000e+00> : vector<8x128xf32>
    %100 = tpu.matmul %66, %99, %cst_45 {dimension_numbers = #tpu.dot_dimension_numbers<[1], [0], [0], [1], [0, 0, 1, 1], [], []>} : vector<8x32xbf16>, vector<32x128xbf16>, vector<8x128xf32> -> vector<8x128xf32>
    %101 = arith.addf %98, %100 : vector<8x128xf32>
    %cst_46 = arith.constant 5.000000e-01 : f32
    %102 = vector.broadcast %cst_46 : f32 to vector<8x128xf32>
    %103 = arith.mulf %102, %101 : vector<8x128xf32>
    %104 = math.tanh %103 : vector<8x128xf32>
    %105 = vector.extract_strided_slice %104 {offsets = [0, 0], sizes = [8, 32], strides = [1, 1]} : vector<8x128xf32> to vector<8x32xf32>
    %cst_47 = arith.constant 5.000000e-01 : f32
    %106 = vector.broadcast %cst_47 : f32 to vector<8x32xf32>
    %107 = arith.mulf %106, %105 : vector<8x32xf32>
    %cst_48 = arith.constant 5.000000e-01 : f32
    %108 = vector.broadcast %cst_48 : f32 to vector<8x32xf32>
    %109 = arith.addf %107, %108 : vector<8x32xf32>
    %110 = vector.extract_strided_slice %104 {offsets = [0, 32], sizes = [8, 32], strides = [1, 1]} : vector<8x128xf32> to vector<8x32xf32>
    %cst_49 = arith.constant 5.000000e-01 : f32
    %111 = vector.broadcast %cst_49 : f32 to vector<8x32xf32>
    %112 = arith.mulf %111, %110 : vector<8x32xf32>
    %cst_50 = arith.constant 5.000000e-01 : f32
    %113 = vector.broadcast %cst_50 : f32 to vector<8x32xf32>
    %114 = arith.addf %112, %113 : vector<8x32xf32>
    %115 = vector.extract_strided_slice %104 {offsets = [0, 64], sizes = [8, 32], strides = [1, 1]} : vector<8x128xf32> to vector<8x32xf32>
    %cst_51 = arith.constant 5.000000e-01 : f32
    %116 = vector.broadcast %cst_51 : f32 to vector<8x32xf32>
    %117 = arith.mulf %116, %115 : vector<8x32xf32>
    %cst_52 = arith.constant 5.000000e-01 : f32
    %118 = vector.broadcast %cst_52 : f32 to vector<8x32xf32>
    %119 = arith.addf %117, %118 : vector<8x32xf32>
    %120 = vector.extract_strided_slice %104 {offsets = [0, 96], sizes = [8, 32], strides = [1, 1]} : vector<8x128xf32> to vector<8x32xf32>
    %121 = arith.mulf %114, %63 : vector<8x32xf32>
    %122 = arith.mulf %109, %120 : vector<8x32xf32>
    %123 = arith.addf %121, %122 : vector<8x32xf32>
    %124 = math.tanh %123 : vector<8x32xf32>
    %125 = arith.mulf %119, %124 : vector<8x32xf32>
    %126 = arith.truncf %125 : vector<8x32xf32> to vector<8x32xbf16>
    %c0_53 = arith.constant 0 : index
    %c0_54 = arith.constant 0 : index
    %127 = vector.load %arg6[%c0_53, %c0_54] : memref<32x128xbf16, #tpu.memory_space<vmem>>, vector<32x128xbf16>
    %cst_55 = arith.constant dense<0.000000e+00> : vector<8x128xf32>
    %128 = tpu.matmul %126, %127, %cst_55 {dimension_numbers = #tpu.dot_dimension_numbers<[1], [0], [0], [1], [0, 0, 1, 1], [], []>} : vector<8x32xbf16>, vector<32x128xbf16>, vector<8x128xf32> -> vector<8x128xf32>
    %c0_56 = arith.constant 0 : index
    %c0_57 = arith.constant 0 : index
    %129 = vector.load %arg7[%c0_56, %c0_57] : memref<32x128xbf16, #tpu.memory_space<vmem>>, vector<32x128xbf16>
    %cst_58 = arith.constant dense<0.000000e+00> : vector<8x128xf32>
    %130 = tpu.matmul %97, %129, %cst_58 {dimension_numbers = #tpu.dot_dimension_numbers<[1], [0], [0], [1], [0, 0, 1, 1], [], []>} : vector<8x32xbf16>, vector<32x128xbf16>, vector<8x128xf32> -> vector<8x128xf32>
    %131 = arith.addf %128, %130 : vector<8x128xf32>
    %132 = arith.addf %131, %33 : vector<8x128xf32>
    %cst_59 = arith.constant 5.000000e-01 : f32
    %133 = vector.broadcast %cst_59 : f32 to vector<8x128xf32>
    %134 = arith.mulf %133, %132 : vector<8x128xf32>
    %135 = math.tanh %134 : vector<8x128xf32>
    %136 = vector.extract_strided_slice %135 {offsets = [0, 0], sizes = [8, 32], strides = [1, 1]} : vector<8x128xf32> to vector<8x32xf32>
    %cst_60 = arith.constant 5.000000e-01 : f32
    %137 = vector.broadcast %cst_60 : f32 to vector<8x32xf32>
    %138 = arith.mulf %137, %136 : vector<8x32xf32>
    %cst_61 = arith.constant 5.000000e-01 : f32
    %139 = vector.broadcast %cst_61 : f32 to vector<8x32xf32>
    %140 = arith.addf %138, %139 : vector<8x32xf32>
    %141 = vector.extract_strided_slice %135 {offsets = [0, 32], sizes = [8, 32], strides = [1, 1]} : vector<8x128xf32> to vector<8x32xf32>
    %cst_62 = arith.constant 5.000000e-01 : f32
    %142 = vector.broadcast %cst_62 : f32 to vector<8x32xf32>
    %143 = arith.mulf %142, %141 : vector<8x32xf32>
    %cst_63 = arith.constant 5.000000e-01 : f32
    %144 = vector.broadcast %cst_63 : f32 to vector<8x32xf32>
    %145 = arith.addf %143, %144 : vector<8x32xf32>
    %146 = vector.extract_strided_slice %135 {offsets = [0, 64], sizes = [8, 32], strides = [1, 1]} : vector<8x128xf32> to vector<8x32xf32>
    %cst_64 = arith.constant 5.000000e-01 : f32
    %147 = vector.broadcast %cst_64 : f32 to vector<8x32xf32>
    %148 = arith.mulf %147, %146 : vector<8x32xf32>
    %cst_65 = arith.constant 5.000000e-01 : f32
    %149 = vector.broadcast %cst_65 : f32 to vector<8x32xf32>
    %150 = arith.addf %148, %149 : vector<8x32xf32>
    %151 = vector.extract_strided_slice %135 {offsets = [0, 96], sizes = [8, 32], strides = [1, 1]} : vector<8x128xf32> to vector<8x32xf32>
    %152 = arith.mulf %145, %94 : vector<8x32xf32>
    %153 = arith.mulf %140, %151 : vector<8x32xf32>
    %154 = arith.addf %152, %153 : vector<8x32xf32>
    %155 = math.tanh %154 : vector<8x32xf32>
    %156 = arith.mulf %150, %155 : vector<8x32xf32>
    %157 = arith.truncf %156 : vector<8x32xf32> to vector<8x32xbf16>
    %158 = vector.extract_strided_slice %30 {offsets = [16, 0], sizes = [8, 128], strides = [1, 1]} : vector<64x128xf32> to vector<8x128xf32>
    %c0_66 = arith.constant 0 : index
    %c0_67 = arith.constant 0 : index
    %159 = vector.load %arg4[%c0_66, %c0_67] : memref<32x128xbf16, #tpu.memory_space<vmem>>, vector<32x128xbf16>
    %cst_68 = arith.constant dense<0.000000e+00> : vector<8x128xf32>
    %160 = tpu.matmul %126, %159, %cst_68 {dimension_numbers = #tpu.dot_dimension_numbers<[1], [0], [0], [1], [0, 0, 1, 1], [], []>} : vector<8x32xbf16>, vector<32x128xbf16>, vector<8x128xf32> -> vector<8x128xf32>
    %161 = arith.addf %158, %160 : vector<8x128xf32>
    %cst_69 = arith.constant 5.000000e-01 : f32
    %162 = vector.broadcast %cst_69 : f32 to vector<8x128xf32>
    %163 = arith.mulf %162, %161 : vector<8x128xf32>
    %164 = math.tanh %163 : vector<8x128xf32>
    %165 = vector.extract_strided_slice %164 {offsets = [0, 0], sizes = [8, 32], strides = [1, 1]} : vector<8x128xf32> to vector<8x32xf32>
    %cst_70 = arith.constant 5.000000e-01 : f32
    %166 = vector.broadcast %cst_70 : f32 to vector<8x32xf32>
    %167 = arith.mulf %166, %165 : vector<8x32xf32>
    %cst_71 = arith.constant 5.000000e-01 : f32
    %168 = vector.broadcast %cst_71 : f32 to vector<8x32xf32>
    %169 = arith.addf %167, %168 : vector<8x32xf32>
    %170 = vector.extract_strided_slice %164 {offsets = [0, 32], sizes = [8, 32], strides = [1, 1]} : vector<8x128xf32> to vector<8x32xf32>
    %cst_72 = arith.constant 5.000000e-01 : f32
    %171 = vector.broadcast %cst_72 : f32 to vector<8x32xf32>
    %172 = arith.mulf %171, %170 : vector<8x32xf32>
    %cst_73 = arith.constant 5.000000e-01 : f32
    %173 = vector.broadcast %cst_73 : f32 to vector<8x32xf32>
    %174 = arith.addf %172, %173 : vector<8x32xf32>
    %175 = vector.extract_strided_slice %164 {offsets = [0, 64], sizes = [8, 32], strides = [1, 1]} : vector<8x128xf32> to vector<8x32xf32>
    %cst_74 = arith.constant 5.000000e-01 : f32
    %176 = vector.broadcast %cst_74 : f32 to vector<8x32xf32>
    %177 = arith.mulf %176, %175 : vector<8x32xf32>
    %cst_75 = arith.constant 5.000000e-01 : f32
    %178 = vector.broadcast %cst_75 : f32 to vector<8x32xf32>
    %179 = arith.addf %177, %178 : vector<8x32xf32>
    %180 = vector.extract_strided_slice %164 {offsets = [0, 96], sizes = [8, 32], strides = [1, 1]} : vector<8x128xf32> to vector<8x32xf32>
    %181 = arith.mulf %174, %123 : vector<8x32xf32>
    %182 = arith.mulf %169, %180 : vector<8x32xf32>
    %183 = arith.addf %181, %182 : vector<8x32xf32>
    %184 = math.tanh %183 : vector<8x32xf32>
    %185 = arith.mulf %179, %184 : vector<8x32xf32>
    %186 = arith.truncf %185 : vector<8x32xf32> to vector<8x32xbf16>
    %c0_76 = arith.constant 0 : index
    %c0_77 = arith.constant 0 : index
    %187 = vector.load %arg6[%c0_76, %c0_77] : memref<32x128xbf16, #tpu.memory_space<vmem>>, vector<32x128xbf16>
    %cst_78 = arith.constant dense<0.000000e+00> : vector<8x128xf32>
    %188 = tpu.matmul %186, %187, %cst_78 {dimension_numbers = #tpu.dot_dimension_numbers<[1], [0], [0], [1], [0, 0, 1, 1], [], []>} : vector<8x32xbf16>, vector<32x128xbf16>, vector<8x128xf32> -> vector<8x128xf32>
    %c0_79 = arith.constant 0 : index
    %c0_80 = arith.constant 0 : index
    %189 = vector.load %arg7[%c0_79, %c0_80] : memref<32x128xbf16, #tpu.memory_space<vmem>>, vector<32x128xbf16>
    %cst_81 = arith.constant dense<0.000000e+00> : vector<8x128xf32>
    %190 = tpu.matmul %157, %189, %cst_81 {dimension_numbers = #tpu.dot_dimension_numbers<[1], [0], [0], [1], [0, 0, 1, 1], [], []>} : vector<8x32xbf16>, vector<32x128xbf16>, vector<8x128xf32> -> vector<8x128xf32>
    %191 = arith.addf %188, %190 : vector<8x128xf32>
    %192 = arith.addf %191, %33 : vector<8x128xf32>
    %cst_82 = arith.constant 5.000000e-01 : f32
    %193 = vector.broadcast %cst_82 : f32 to vector<8x128xf32>
    %194 = arith.mulf %193, %192 : vector<8x128xf32>
    %195 = math.tanh %194 : vector<8x128xf32>
    %196 = vector.extract_strided_slice %195 {offsets = [0, 0], sizes = [8, 32], strides = [1, 1]} : vector<8x128xf32> to vector<8x32xf32>
    %cst_83 = arith.constant 5.000000e-01 : f32
    %197 = vector.broadcast %cst_83 : f32 to vector<8x32xf32>
    %198 = arith.mulf %197, %196 : vector<8x32xf32>
    %cst_84 = arith.constant 5.000000e-01 : f32
    %199 = vector.broadcast %cst_84 : f32 to vector<8x32xf32>
    %200 = arith.addf %198, %199 : vector<8x32xf32>
    %201 = vector.extract_strided_slice %195 {offsets = [0, 32], sizes = [8, 32], strides = [1, 1]} : vector<8x128xf32> to vector<8x32xf32>
    %cst_85 = arith.constant 5.000000e-01 : f32
    %202 = vector.broadcast %cst_85 : f32 to vector<8x32xf32>
    %203 = arith.mulf %202, %201 : vector<8x32xf32>
    %cst_86 = arith.constant 5.000000e-01 : f32
    %204 = vector.broadcast %cst_86 : f32 to vector<8x32xf32>
    %205 = arith.addf %203, %204 : vector<8x32xf32>
    %206 = vector.extract_strided_slice %195 {offsets = [0, 64], sizes = [8, 32], strides = [1, 1]} : vector<8x128xf32> to vector<8x32xf32>
    %cst_87 = arith.constant 5.000000e-01 : f32
    %207 = vector.broadcast %cst_87 : f32 to vector<8x32xf32>
    %208 = arith.mulf %207, %206 : vector<8x32xf32>
    %cst_88 = arith.constant 5.000000e-01 : f32
    %209 = vector.broadcast %cst_88 : f32 to vector<8x32xf32>
    %210 = arith.addf %208, %209 : vector<8x32xf32>
    %211 = vector.extract_strided_slice %195 {offsets = [0, 96], sizes = [8, 32], strides = [1, 1]} : vector<8x128xf32> to vector<8x32xf32>
    %212 = arith.mulf %205, %154 : vector<8x32xf32>
    %213 = arith.mulf %200, %211 : vector<8x32xf32>
    %214 = arith.addf %212, %213 : vector<8x32xf32>
    %215 = math.tanh %214 : vector<8x32xf32>
    %216 = arith.mulf %210, %215 : vector<8x32xf32>
    %217 = arith.truncf %216 : vector<8x32xf32> to vector<8x32xbf16>
    %218 = vector.extract_strided_slice %30 {offsets = [24, 0], sizes = [8, 128], strides = [1, 1]} : vector<64x128xf32> to vector<8x128xf32>
    %c0_89 = arith.constant 0 : index
    %c0_90 = arith.constant 0 : index
    %219 = vector.load %arg4[%c0_89, %c0_90] : memref<32x128xbf16, #tpu.memory_space<vmem>>, vector<32x128xbf16>
    %cst_91 = arith.constant dense<0.000000e+00> : vector<8x128xf32>
    %220 = tpu.matmul %186, %219, %cst_91 {dimension_numbers = #tpu.dot_dimension_numbers<[1], [0], [0], [1], [0, 0, 1, 1], [], []>} : vector<8x32xbf16>, vector<32x128xbf16>, vector<8x128xf32> -> vector<8x128xf32>
    %221 = arith.addf %218, %220 : vector<8x128xf32>
    %cst_92 = arith.constant 5.000000e-01 : f32
    %222 = vector.broadcast %cst_92 : f32 to vector<8x128xf32>
    %223 = arith.mulf %222, %221 : vector<8x128xf32>
    %224 = math.tanh %223 : vector<8x128xf32>
    %225 = vector.extract_strided_slice %224 {offsets = [0, 0], sizes = [8, 32], strides = [1, 1]} : vector<8x128xf32> to vector<8x32xf32>
    %cst_93 = arith.constant 5.000000e-01 : f32
    %226 = vector.broadcast %cst_93 : f32 to vector<8x32xf32>
    %227 = arith.mulf %226, %225 : vector<8x32xf32>
    %cst_94 = arith.constant 5.000000e-01 : f32
    %228 = vector.broadcast %cst_94 : f32 to vector<8x32xf32>
    %229 = arith.addf %227, %228 : vector<8x32xf32>
    %230 = vector.extract_strided_slice %224 {offsets = [0, 32], sizes = [8, 32], strides = [1, 1]} : vector<8x128xf32> to vector<8x32xf32>
    %cst_95 = arith.constant 5.000000e-01 : f32
    %231 = vector.broadcast %cst_95 : f32 to vector<8x32xf32>
    %232 = arith.mulf %231, %230 : vector<8x32xf32>
    %cst_96 = arith.constant 5.000000e-01 : f32
    %233 = vector.broadcast %cst_96 : f32 to vector<8x32xf32>
    %234 = arith.addf %232, %233 : vector<8x32xf32>
    %235 = vector.extract_strided_slice %224 {offsets = [0, 64], sizes = [8, 32], strides = [1, 1]} : vector<8x128xf32> to vector<8x32xf32>
    %cst_97 = arith.constant 5.000000e-01 : f32
    %236 = vector.broadcast %cst_97 : f32 to vector<8x32xf32>
    %237 = arith.mulf %236, %235 : vector<8x32xf32>
    %cst_98 = arith.constant 5.000000e-01 : f32
    %238 = vector.broadcast %cst_98 : f32 to vector<8x32xf32>
    %239 = arith.addf %237, %238 : vector<8x32xf32>
    %240 = vector.extract_strided_slice %224 {offsets = [0, 96], sizes = [8, 32], strides = [1, 1]} : vector<8x128xf32> to vector<8x32xf32>
    %241 = arith.mulf %234, %183 : vector<8x32xf32>
    %242 = arith.mulf %229, %240 : vector<8x32xf32>
    %243 = arith.addf %241, %242 : vector<8x32xf32>
    %244 = math.tanh %243 : vector<8x32xf32>
    %245 = arith.mulf %239, %244 : vector<8x32xf32>
    %246 = arith.truncf %245 : vector<8x32xf32> to vector<8x32xbf16>
    %c0_99 = arith.constant 0 : index
    %c0_100 = arith.constant 0 : index
    %247 = vector.load %arg6[%c0_99, %c0_100] : memref<32x128xbf16, #tpu.memory_space<vmem>>, vector<32x128xbf16>
    %cst_101 = arith.constant dense<0.000000e+00> : vector<8x128xf32>
    %248 = tpu.matmul %246, %247, %cst_101 {dimension_numbers = #tpu.dot_dimension_numbers<[1], [0], [0], [1], [0, 0, 1, 1], [], []>} : vector<8x32xbf16>, vector<32x128xbf16>, vector<8x128xf32> -> vector<8x128xf32>
    %c0_102 = arith.constant 0 : index
    %c0_103 = arith.constant 0 : index
    %249 = vector.load %arg7[%c0_102, %c0_103] : memref<32x128xbf16, #tpu.memory_space<vmem>>, vector<32x128xbf16>
    %cst_104 = arith.constant dense<0.000000e+00> : vector<8x128xf32>
    %250 = tpu.matmul %217, %249, %cst_104 {dimension_numbers = #tpu.dot_dimension_numbers<[1], [0], [0], [1], [0, 0, 1, 1], [], []>} : vector<8x32xbf16>, vector<32x128xbf16>, vector<8x128xf32> -> vector<8x128xf32>
    %251 = arith.addf %248, %250 : vector<8x128xf32>
    %252 = arith.addf %251, %33 : vector<8x128xf32>
    %cst_105 = arith.constant 5.000000e-01 : f32
    %253 = vector.broadcast %cst_105 : f32 to vector<8x128xf32>
    %254 = arith.mulf %253, %252 : vector<8x128xf32>
    %255 = math.tanh %254 : vector<8x128xf32>
    %256 = vector.extract_strided_slice %255 {offsets = [0, 0], sizes = [8, 32], strides = [1, 1]} : vector<8x128xf32> to vector<8x32xf32>
    %cst_106 = arith.constant 5.000000e-01 : f32
    %257 = vector.broadcast %cst_106 : f32 to vector<8x32xf32>
    %258 = arith.mulf %257, %256 : vector<8x32xf32>
    %cst_107 = arith.constant 5.000000e-01 : f32
    %259 = vector.broadcast %cst_107 : f32 to vector<8x32xf32>
    %260 = arith.addf %258, %259 : vector<8x32xf32>
    %261 = vector.extract_strided_slice %255 {offsets = [0, 32], sizes = [8, 32], strides = [1, 1]} : vector<8x128xf32> to vector<8x32xf32>
    %cst_108 = arith.constant 5.000000e-01 : f32
    %262 = vector.broadcast %cst_108 : f32 to vector<8x32xf32>
    %263 = arith.mulf %262, %261 : vector<8x32xf32>
    %cst_109 = arith.constant 5.000000e-01 : f32
    %264 = vector.broadcast %cst_109 : f32 to vector<8x32xf32>
    %265 = arith.addf %263, %264 : vector<8x32xf32>
    %266 = vector.extract_strided_slice %255 {offsets = [0, 64], sizes = [8, 32], strides = [1, 1]} : vector<8x128xf32> to vector<8x32xf32>
    %cst_110 = arith.constant 5.000000e-01 : f32
    %267 = vector.broadcast %cst_110 : f32 to vector<8x32xf32>
    %268 = arith.mulf %267, %266 : vector<8x32xf32>
    %cst_111 = arith.constant 5.000000e-01 : f32
    %269 = vector.broadcast %cst_111 : f32 to vector<8x32xf32>
    %270 = arith.addf %268, %269 : vector<8x32xf32>
    %271 = vector.extract_strided_slice %255 {offsets = [0, 96], sizes = [8, 32], strides = [1, 1]} : vector<8x128xf32> to vector<8x32xf32>
    %272 = arith.mulf %265, %214 : vector<8x32xf32>
    %273 = arith.mulf %260, %271 : vector<8x32xf32>
    %274 = arith.addf %272, %273 : vector<8x32xf32>
    %275 = math.tanh %274 : vector<8x32xf32>
    %276 = arith.mulf %270, %275 : vector<8x32xf32>
    %277 = arith.truncf %276 : vector<8x32xf32> to vector<8x32xbf16>
    %278 = vector.extract_strided_slice %30 {offsets = [32, 0], sizes = [8, 128], strides = [1, 1]} : vector<64x128xf32> to vector<8x128xf32>
    %c0_112 = arith.constant 0 : index
    %c0_113 = arith.constant 0 : index
    %279 = vector.load %arg4[%c0_112, %c0_113] : memref<32x128xbf16, #tpu.memory_space<vmem>>, vector<32x128xbf16>
    %cst_114 = arith.constant dense<0.000000e+00> : vector<8x128xf32>
    %280 = tpu.matmul %246, %279, %cst_114 {dimension_numbers = #tpu.dot_dimension_numbers<[1], [0], [0], [1], [0, 0, 1, 1], [], []>} : vector<8x32xbf16>, vector<32x128xbf16>, vector<8x128xf32> -> vector<8x128xf32>
    %281 = arith.addf %278, %280 : vector<8x128xf32>
    %cst_115 = arith.constant 5.000000e-01 : f32
    %282 = vector.broadcast %cst_115 : f32 to vector<8x128xf32>
    %283 = arith.mulf %282, %281 : vector<8x128xf32>
    %284 = math.tanh %283 : vector<8x128xf32>
    %285 = vector.extract_strided_slice %284 {offsets = [0, 0], sizes = [8, 32], strides = [1, 1]} : vector<8x128xf32> to vector<8x32xf32>
    %cst_116 = arith.constant 5.000000e-01 : f32
    %286 = vector.broadcast %cst_116 : f32 to vector<8x32xf32>
    %287 = arith.mulf %286, %285 : vector<8x32xf32>
    %cst_117 = arith.constant 5.000000e-01 : f32
    %288 = vector.broadcast %cst_117 : f32 to vector<8x32xf32>
    %289 = arith.addf %287, %288 : vector<8x32xf32>
    %290 = vector.extract_strided_slice %284 {offsets = [0, 32], sizes = [8, 32], strides = [1, 1]} : vector<8x128xf32> to vector<8x32xf32>
    %cst_118 = arith.constant 5.000000e-01 : f32
    %291 = vector.broadcast %cst_118 : f32 to vector<8x32xf32>
    %292 = arith.mulf %291, %290 : vector<8x32xf32>
    %cst_119 = arith.constant 5.000000e-01 : f32
    %293 = vector.broadcast %cst_119 : f32 to vector<8x32xf32>
    %294 = arith.addf %292, %293 : vector<8x32xf32>
    %295 = vector.extract_strided_slice %284 {offsets = [0, 64], sizes = [8, 32], strides = [1, 1]} : vector<8x128xf32> to vector<8x32xf32>
    %cst_120 = arith.constant 5.000000e-01 : f32
    %296 = vector.broadcast %cst_120 : f32 to vector<8x32xf32>
    %297 = arith.mulf %296, %295 : vector<8x32xf32>
    %cst_121 = arith.constant 5.000000e-01 : f32
    %298 = vector.broadcast %cst_121 : f32 to vector<8x32xf32>
    %299 = arith.addf %297, %298 : vector<8x32xf32>
    %300 = vector.extract_strided_slice %284 {offsets = [0, 96], sizes = [8, 32], strides = [1, 1]} : vector<8x128xf32> to vector<8x32xf32>
    %301 = arith.mulf %294, %243 : vector<8x32xf32>
    %302 = arith.mulf %289, %300 : vector<8x32xf32>
    %303 = arith.addf %301, %302 : vector<8x32xf32>
    %304 = math.tanh %303 : vector<8x32xf32>
    %305 = arith.mulf %299, %304 : vector<8x32xf32>
    %306 = arith.truncf %305 : vector<8x32xf32> to vector<8x32xbf16>
    %c0_122 = arith.constant 0 : index
    %c0_123 = arith.constant 0 : index
    %307 = vector.load %arg6[%c0_122, %c0_123] : memref<32x128xbf16, #tpu.memory_space<vmem>>, vector<32x128xbf16>
    %cst_124 = arith.constant dense<0.000000e+00> : vector<8x128xf32>
    %308 = tpu.matmul %306, %307, %cst_124 {dimension_numbers = #tpu.dot_dimension_numbers<[1], [0], [0], [1], [0, 0, 1, 1], [], []>} : vector<8x32xbf16>, vector<32x128xbf16>, vector<8x128xf32> -> vector<8x128xf32>
    %c0_125 = arith.constant 0 : index
    %c0_126 = arith.constant 0 : index
    %309 = vector.load %arg7[%c0_125, %c0_126] : memref<32x128xbf16, #tpu.memory_space<vmem>>, vector<32x128xbf16>
    %cst_127 = arith.constant dense<0.000000e+00> : vector<8x128xf32>
    %310 = tpu.matmul %277, %309, %cst_127 {dimension_numbers = #tpu.dot_dimension_numbers<[1], [0], [0], [1], [0, 0, 1, 1], [], []>} : vector<8x32xbf16>, vector<32x128xbf16>, vector<8x128xf32> -> vector<8x128xf32>
    %311 = arith.addf %308, %310 : vector<8x128xf32>
    %312 = arith.addf %311, %33 : vector<8x128xf32>
    %cst_128 = arith.constant 5.000000e-01 : f32
    %313 = vector.broadcast %cst_128 : f32 to vector<8x128xf32>
    %314 = arith.mulf %313, %312 : vector<8x128xf32>
    %315 = math.tanh %314 : vector<8x128xf32>
    %316 = vector.extract_strided_slice %315 {offsets = [0, 0], sizes = [8, 32], strides = [1, 1]} : vector<8x128xf32> to vector<8x32xf32>
    %cst_129 = arith.constant 5.000000e-01 : f32
    %317 = vector.broadcast %cst_129 : f32 to vector<8x32xf32>
    %318 = arith.mulf %317, %316 : vector<8x32xf32>
    %cst_130 = arith.constant 5.000000e-01 : f32
    %319 = vector.broadcast %cst_130 : f32 to vector<8x32xf32>
    %320 = arith.addf %318, %319 : vector<8x32xf32>
    %321 = vector.extract_strided_slice %315 {offsets = [0, 32], sizes = [8, 32], strides = [1, 1]} : vector<8x128xf32> to vector<8x32xf32>
    %cst_131 = arith.constant 5.000000e-01 : f32
    %322 = vector.broadcast %cst_131 : f32 to vector<8x32xf32>
    %323 = arith.mulf %322, %321 : vector<8x32xf32>
    %cst_132 = arith.constant 5.000000e-01 : f32
    %324 = vector.broadcast %cst_132 : f32 to vector<8x32xf32>
    %325 = arith.addf %323, %324 : vector<8x32xf32>
    %326 = vector.extract_strided_slice %315 {offsets = [0, 64], sizes = [8, 32], strides = [1, 1]} : vector<8x128xf32> to vector<8x32xf32>
    %cst_133 = arith.constant 5.000000e-01 : f32
    %327 = vector.broadcast %cst_133 : f32 to vector<8x32xf32>
    %328 = arith.mulf %327, %326 : vector<8x32xf32>
    %cst_134 = arith.constant 5.000000e-01 : f32
    %329 = vector.broadcast %cst_134 : f32 to vector<8x32xf32>
    %330 = arith.addf %328, %329 : vector<8x32xf32>
    %331 = vector.extract_strided_slice %315 {offsets = [0, 96], sizes = [8, 32], strides = [1, 1]} : vector<8x128xf32> to vector<8x32xf32>
    %332 = arith.mulf %325, %274 : vector<8x32xf32>
    %333 = arith.mulf %320, %331 : vector<8x32xf32>
    %334 = arith.addf %332, %333 : vector<8x32xf32>
    %335 = math.tanh %334 : vector<8x32xf32>
    %336 = arith.mulf %330, %335 : vector<8x32xf32>
    %337 = arith.truncf %336 : vector<8x32xf32> to vector<8x32xbf16>
    %338 = vector.extract_strided_slice %30 {offsets = [40, 0], sizes = [8, 128], strides = [1, 1]} : vector<64x128xf32> to vector<8x128xf32>
    %c0_135 = arith.constant 0 : index
    %c0_136 = arith.constant 0 : index
    %339 = vector.load %arg4[%c0_135, %c0_136] : memref<32x128xbf16, #tpu.memory_space<vmem>>, vector<32x128xbf16>
    %cst_137 = arith.constant dense<0.000000e+00> : vector<8x128xf32>
    %340 = tpu.matmul %306, %339, %cst_137 {dimension_numbers = #tpu.dot_dimension_numbers<[1], [0], [0], [1], [0, 0, 1, 1], [], []>} : vector<8x32xbf16>, vector<32x128xbf16>, vector<8x128xf32> -> vector<8x128xf32>
    %341 = arith.addf %338, %340 : vector<8x128xf32>
    %cst_138 = arith.constant 5.000000e-01 : f32
    %342 = vector.broadcast %cst_138 : f32 to vector<8x128xf32>
    %343 = arith.mulf %342, %341 : vector<8x128xf32>
    %344 = math.tanh %343 : vector<8x128xf32>
    %345 = vector.extract_strided_slice %344 {offsets = [0, 0], sizes = [8, 32], strides = [1, 1]} : vector<8x128xf32> to vector<8x32xf32>
    %cst_139 = arith.constant 5.000000e-01 : f32
    %346 = vector.broadcast %cst_139 : f32 to vector<8x32xf32>
    %347 = arith.mulf %346, %345 : vector<8x32xf32>
    %cst_140 = arith.constant 5.000000e-01 : f32
    %348 = vector.broadcast %cst_140 : f32 to vector<8x32xf32>
    %349 = arith.addf %347, %348 : vector<8x32xf32>
    %350 = vector.extract_strided_slice %344 {offsets = [0, 32], sizes = [8, 32], strides = [1, 1]} : vector<8x128xf32> to vector<8x32xf32>
    %cst_141 = arith.constant 5.000000e-01 : f32
    %351 = vector.broadcast %cst_141 : f32 to vector<8x32xf32>
    %352 = arith.mulf %351, %350 : vector<8x32xf32>
    %cst_142 = arith.constant 5.000000e-01 : f32
    %353 = vector.broadcast %cst_142 : f32 to vector<8x32xf32>
    %354 = arith.addf %352, %353 : vector<8x32xf32>
    %355 = vector.extract_strided_slice %344 {offsets = [0, 64], sizes = [8, 32], strides = [1, 1]} : vector<8x128xf32> to vector<8x32xf32>
    %cst_143 = arith.constant 5.000000e-01 : f32
    %356 = vector.broadcast %cst_143 : f32 to vector<8x32xf32>
    %357 = arith.mulf %356, %355 : vector<8x32xf32>
    %cst_144 = arith.constant 5.000000e-01 : f32
    %358 = vector.broadcast %cst_144 : f32 to vector<8x32xf32>
    %359 = arith.addf %357, %358 : vector<8x32xf32>
    %360 = vector.extract_strided_slice %344 {offsets = [0, 96], sizes = [8, 32], strides = [1, 1]} : vector<8x128xf32> to vector<8x32xf32>
    %361 = arith.mulf %354, %303 : vector<8x32xf32>
    %362 = arith.mulf %349, %360 : vector<8x32xf32>
    %363 = arith.addf %361, %362 : vector<8x32xf32>
    %364 = math.tanh %363 : vector<8x32xf32>
    %365 = arith.mulf %359, %364 : vector<8x32xf32>
    %366 = arith.truncf %365 : vector<8x32xf32> to vector<8x32xbf16>
    %c0_145 = arith.constant 0 : index
    %c0_146 = arith.constant 0 : index
    %367 = vector.load %arg6[%c0_145, %c0_146] : memref<32x128xbf16, #tpu.memory_space<vmem>>, vector<32x128xbf16>
    %cst_147 = arith.constant dense<0.000000e+00> : vector<8x128xf32>
    %368 = tpu.matmul %366, %367, %cst_147 {dimension_numbers = #tpu.dot_dimension_numbers<[1], [0], [0], [1], [0, 0, 1, 1], [], []>} : vector<8x32xbf16>, vector<32x128xbf16>, vector<8x128xf32> -> vector<8x128xf32>
    %c0_148 = arith.constant 0 : index
    %c0_149 = arith.constant 0 : index
    %369 = vector.load %arg7[%c0_148, %c0_149] : memref<32x128xbf16, #tpu.memory_space<vmem>>, vector<32x128xbf16>
    %cst_150 = arith.constant dense<0.000000e+00> : vector<8x128xf32>
    %370 = tpu.matmul %337, %369, %cst_150 {dimension_numbers = #tpu.dot_dimension_numbers<[1], [0], [0], [1], [0, 0, 1, 1], [], []>} : vector<8x32xbf16>, vector<32x128xbf16>, vector<8x128xf32> -> vector<8x128xf32>
    %371 = arith.addf %368, %370 : vector<8x128xf32>
    %372 = arith.addf %371, %33 : vector<8x128xf32>
    %cst_151 = arith.constant 5.000000e-01 : f32
    %373 = vector.broadcast %cst_151 : f32 to vector<8x128xf32>
    %374 = arith.mulf %373, %372 : vector<8x128xf32>
    %375 = math.tanh %374 : vector<8x128xf32>
    %376 = vector.extract_strided_slice %375 {offsets = [0, 0], sizes = [8, 32], strides = [1, 1]} : vector<8x128xf32> to vector<8x32xf32>
    %cst_152 = arith.constant 5.000000e-01 : f32
    %377 = vector.broadcast %cst_152 : f32 to vector<8x32xf32>
    %378 = arith.mulf %377, %376 : vector<8x32xf32>
    %cst_153 = arith.constant 5.000000e-01 : f32
    %379 = vector.broadcast %cst_153 : f32 to vector<8x32xf32>
    %380 = arith.addf %378, %379 : vector<8x32xf32>
    %381 = vector.extract_strided_slice %375 {offsets = [0, 32], sizes = [8, 32], strides = [1, 1]} : vector<8x128xf32> to vector<8x32xf32>
    %cst_154 = arith.constant 5.000000e-01 : f32
    %382 = vector.broadcast %cst_154 : f32 to vector<8x32xf32>
    %383 = arith.mulf %382, %381 : vector<8x32xf32>
    %cst_155 = arith.constant 5.000000e-01 : f32
    %384 = vector.broadcast %cst_155 : f32 to vector<8x32xf32>
    %385 = arith.addf %383, %384 : vector<8x32xf32>
    %386 = vector.extract_strided_slice %375 {offsets = [0, 64], sizes = [8, 32], strides = [1, 1]} : vector<8x128xf32> to vector<8x32xf32>
    %cst_156 = arith.constant 5.000000e-01 : f32
    %387 = vector.broadcast %cst_156 : f32 to vector<8x32xf32>
    %388 = arith.mulf %387, %386 : vector<8x32xf32>
    %cst_157 = arith.constant 5.000000e-01 : f32
    %389 = vector.broadcast %cst_157 : f32 to vector<8x32xf32>
    %390 = arith.addf %388, %389 : vector<8x32xf32>
    %391 = vector.extract_strided_slice %375 {offsets = [0, 96], sizes = [8, 32], strides = [1, 1]} : vector<8x128xf32> to vector<8x32xf32>
    %392 = arith.mulf %385, %334 : vector<8x32xf32>
    %393 = arith.mulf %380, %391 : vector<8x32xf32>
    %394 = arith.addf %392, %393 : vector<8x32xf32>
    %395 = math.tanh %394 : vector<8x32xf32>
    %396 = arith.mulf %390, %395 : vector<8x32xf32>
    %397 = arith.truncf %396 : vector<8x32xf32> to vector<8x32xbf16>
    %398 = vector.extract_strided_slice %30 {offsets = [48, 0], sizes = [8, 128], strides = [1, 1]} : vector<64x128xf32> to vector<8x128xf32>
    %c0_158 = arith.constant 0 : index
    %c0_159 = arith.constant 0 : index
    %399 = vector.load %arg4[%c0_158, %c0_159] : memref<32x128xbf16, #tpu.memory_space<vmem>>, vector<32x128xbf16>
    %cst_160 = arith.constant dense<0.000000e+00> : vector<8x128xf32>
    %400 = tpu.matmul %366, %399, %cst_160 {dimension_numbers = #tpu.dot_dimension_numbers<[1], [0], [0], [1], [0, 0, 1, 1], [], []>} : vector<8x32xbf16>, vector<32x128xbf16>, vector<8x128xf32> -> vector<8x128xf32>
    %401 = arith.addf %398, %400 : vector<8x128xf32>
    %cst_161 = arith.constant 5.000000e-01 : f32
    %402 = vector.broadcast %cst_161 : f32 to vector<8x128xf32>
    %403 = arith.mulf %402, %401 : vector<8x128xf32>
    %404 = math.tanh %403 : vector<8x128xf32>
    %405 = vector.extract_strided_slice %404 {offsets = [0, 0], sizes = [8, 32], strides = [1, 1]} : vector<8x128xf32> to vector<8x32xf32>
    %cst_162 = arith.constant 5.000000e-01 : f32
    %406 = vector.broadcast %cst_162 : f32 to vector<8x32xf32>
    %407 = arith.mulf %406, %405 : vector<8x32xf32>
    %cst_163 = arith.constant 5.000000e-01 : f32
    %408 = vector.broadcast %cst_163 : f32 to vector<8x32xf32>
    %409 = arith.addf %407, %408 : vector<8x32xf32>
    %410 = vector.extract_strided_slice %404 {offsets = [0, 32], sizes = [8, 32], strides = [1, 1]} : vector<8x128xf32> to vector<8x32xf32>
    %cst_164 = arith.constant 5.000000e-01 : f32
    %411 = vector.broadcast %cst_164 : f32 to vector<8x32xf32>
    %412 = arith.mulf %411, %410 : vector<8x32xf32>
    %cst_165 = arith.constant 5.000000e-01 : f32
    %413 = vector.broadcast %cst_165 : f32 to vector<8x32xf32>
    %414 = arith.addf %412, %413 : vector<8x32xf32>
    %415 = vector.extract_strided_slice %404 {offsets = [0, 64], sizes = [8, 32], strides = [1, 1]} : vector<8x128xf32> to vector<8x32xf32>
    %cst_166 = arith.constant 5.000000e-01 : f32
    %416 = vector.broadcast %cst_166 : f32 to vector<8x32xf32>
    %417 = arith.mulf %416, %415 : vector<8x32xf32>
    %cst_167 = arith.constant 5.000000e-01 : f32
    %418 = vector.broadcast %cst_167 : f32 to vector<8x32xf32>
    %419 = arith.addf %417, %418 : vector<8x32xf32>
    %420 = vector.extract_strided_slice %404 {offsets = [0, 96], sizes = [8, 32], strides = [1, 1]} : vector<8x128xf32> to vector<8x32xf32>
    %421 = arith.mulf %414, %363 : vector<8x32xf32>
    %422 = arith.mulf %409, %420 : vector<8x32xf32>
    %423 = arith.addf %421, %422 : vector<8x32xf32>
    %424 = math.tanh %423 : vector<8x32xf32>
    %425 = arith.mulf %419, %424 : vector<8x32xf32>
    %426 = arith.truncf %425 : vector<8x32xf32> to vector<8x32xbf16>
    %c0_168 = arith.constant 0 : index
    %c0_169 = arith.constant 0 : index
    %427 = vector.load %arg6[%c0_168, %c0_169] : memref<32x128xbf16, #tpu.memory_space<vmem>>, vector<32x128xbf16>
    %cst_170 = arith.constant dense<0.000000e+00> : vector<8x128xf32>
    %428 = tpu.matmul %426, %427, %cst_170 {dimension_numbers = #tpu.dot_dimension_numbers<[1], [0], [0], [1], [0, 0, 1, 1], [], []>} : vector<8x32xbf16>, vector<32x128xbf16>, vector<8x128xf32> -> vector<8x128xf32>
    %c0_171 = arith.constant 0 : index
    %c0_172 = arith.constant 0 : index
    %429 = vector.load %arg7[%c0_171, %c0_172] : memref<32x128xbf16, #tpu.memory_space<vmem>>, vector<32x128xbf16>
    %cst_173 = arith.constant dense<0.000000e+00> : vector<8x128xf32>
    %430 = tpu.matmul %397, %429, %cst_173 {dimension_numbers = #tpu.dot_dimension_numbers<[1], [0], [0], [1], [0, 0, 1, 1], [], []>} : vector<8x32xbf16>, vector<32x128xbf16>, vector<8x128xf32> -> vector<8x128xf32>
    %431 = arith.addf %428, %430 : vector<8x128xf32>
    %432 = arith.addf %431, %33 : vector<8x128xf32>
    %cst_174 = arith.constant 5.000000e-01 : f32
    %433 = vector.broadcast %cst_174 : f32 to vector<8x128xf32>
    %434 = arith.mulf %433, %432 : vector<8x128xf32>
    %435 = math.tanh %434 : vector<8x128xf32>
    %436 = vector.extract_strided_slice %435 {offsets = [0, 0], sizes = [8, 32], strides = [1, 1]} : vector<8x128xf32> to vector<8x32xf32>
    %cst_175 = arith.constant 5.000000e-01 : f32
    %437 = vector.broadcast %cst_175 : f32 to vector<8x32xf32>
    %438 = arith.mulf %437, %436 : vector<8x32xf32>
    %cst_176 = arith.constant 5.000000e-01 : f32
    %439 = vector.broadcast %cst_176 : f32 to vector<8x32xf32>
    %440 = arith.addf %438, %439 : vector<8x32xf32>
    %441 = vector.extract_strided_slice %435 {offsets = [0, 32], sizes = [8, 32], strides = [1, 1]} : vector<8x128xf32> to vector<8x32xf32>
    %cst_177 = arith.constant 5.000000e-01 : f32
    %442 = vector.broadcast %cst_177 : f32 to vector<8x32xf32>
    %443 = arith.mulf %442, %441 : vector<8x32xf32>
    %cst_178 = arith.constant 5.000000e-01 : f32
    %444 = vector.broadcast %cst_178 : f32 to vector<8x32xf32>
    %445 = arith.addf %443, %444 : vector<8x32xf32>
    %446 = vector.extract_strided_slice %435 {offsets = [0, 64], sizes = [8, 32], strides = [1, 1]} : vector<8x128xf32> to vector<8x32xf32>
    %cst_179 = arith.constant 5.000000e-01 : f32
    %447 = vector.broadcast %cst_179 : f32 to vector<8x32xf32>
    %448 = arith.mulf %447, %446 : vector<8x32xf32>
    %cst_180 = arith.constant 5.000000e-01 : f32
    %449 = vector.broadcast %cst_180 : f32 to vector<8x32xf32>
    %450 = arith.addf %448, %449 : vector<8x32xf32>
    %451 = vector.extract_strided_slice %435 {offsets = [0, 96], sizes = [8, 32], strides = [1, 1]} : vector<8x128xf32> to vector<8x32xf32>
    %452 = arith.mulf %445, %394 : vector<8x32xf32>
    %453 = arith.mulf %440, %451 : vector<8x32xf32>
    %454 = arith.addf %452, %453 : vector<8x32xf32>
    %455 = math.tanh %454 : vector<8x32xf32>
    %456 = arith.mulf %450, %455 : vector<8x32xf32>
    %457 = arith.truncf %456 : vector<8x32xf32> to vector<8x32xbf16>
    %458 = vector.extract_strided_slice %30 {offsets = [56, 0], sizes = [8, 128], strides = [1, 1]} : vector<64x128xf32> to vector<8x128xf32>
    %c0_181 = arith.constant 0 : index
    %c0_182 = arith.constant 0 : index
    %459 = vector.load %arg4[%c0_181, %c0_182] : memref<32x128xbf16, #tpu.memory_space<vmem>>, vector<32x128xbf16>
    %cst_183 = arith.constant dense<0.000000e+00> : vector<8x128xf32>
    %460 = tpu.matmul %426, %459, %cst_183 {dimension_numbers = #tpu.dot_dimension_numbers<[1], [0], [0], [1], [0, 0, 1, 1], [], []>} : vector<8x32xbf16>, vector<32x128xbf16>, vector<8x128xf32> -> vector<8x128xf32>
    %461 = arith.addf %458, %460 : vector<8x128xf32>
    %cst_184 = arith.constant 5.000000e-01 : f32
    %462 = vector.broadcast %cst_184 : f32 to vector<8x128xf32>
    %463 = arith.mulf %462, %461 : vector<8x128xf32>
    %464 = math.tanh %463 : vector<8x128xf32>
    %465 = vector.extract_strided_slice %464 {offsets = [0, 0], sizes = [8, 32], strides = [1, 1]} : vector<8x128xf32> to vector<8x32xf32>
    %cst_185 = arith.constant 5.000000e-01 : f32
    %466 = vector.broadcast %cst_185 : f32 to vector<8x32xf32>
    %467 = arith.mulf %466, %465 : vector<8x32xf32>
    %cst_186 = arith.constant 5.000000e-01 : f32
    %468 = vector.broadcast %cst_186 : f32 to vector<8x32xf32>
    %469 = arith.addf %467, %468 : vector<8x32xf32>
    %470 = vector.extract_strided_slice %464 {offsets = [0, 32], sizes = [8, 32], strides = [1, 1]} : vector<8x128xf32> to vector<8x32xf32>
    %cst_187 = arith.constant 5.000000e-01 : f32
    %471 = vector.broadcast %cst_187 : f32 to vector<8x32xf32>
    %472 = arith.mulf %471, %470 : vector<8x32xf32>
    %cst_188 = arith.constant 5.000000e-01 : f32
    %473 = vector.broadcast %cst_188 : f32 to vector<8x32xf32>
    %474 = arith.addf %472, %473 : vector<8x32xf32>
    %475 = vector.extract_strided_slice %464 {offsets = [0, 64], sizes = [8, 32], strides = [1, 1]} : vector<8x128xf32> to vector<8x32xf32>
    %cst_189 = arith.constant 5.000000e-01 : f32
    %476 = vector.broadcast %cst_189 : f32 to vector<8x32xf32>
    %477 = arith.mulf %476, %475 : vector<8x32xf32>
    %cst_190 = arith.constant 5.000000e-01 : f32
    %478 = vector.broadcast %cst_190 : f32 to vector<8x32xf32>
    %479 = arith.addf %477, %478 : vector<8x32xf32>
    %480 = vector.extract_strided_slice %464 {offsets = [0, 96], sizes = [8, 32], strides = [1, 1]} : vector<8x128xf32> to vector<8x32xf32>
    %481 = arith.mulf %474, %423 : vector<8x32xf32>
    %482 = arith.mulf %469, %480 : vector<8x32xf32>
    %483 = arith.addf %481, %482 : vector<8x32xf32>
    %484 = math.tanh %483 : vector<8x32xf32>
    %485 = arith.mulf %479, %484 : vector<8x32xf32>
    %486 = arith.truncf %485 : vector<8x32xf32> to vector<8x32xbf16>
    %c0_191 = arith.constant 0 : index
    %c0_192 = arith.constant 0 : index
    %487 = vector.load %arg6[%c0_191, %c0_192] : memref<32x128xbf16, #tpu.memory_space<vmem>>, vector<32x128xbf16>
    %cst_193 = arith.constant dense<0.000000e+00> : vector<8x128xf32>
    %488 = tpu.matmul %486, %487, %cst_193 {dimension_numbers = #tpu.dot_dimension_numbers<[1], [0], [0], [1], [0, 0, 1, 1], [], []>} : vector<8x32xbf16>, vector<32x128xbf16>, vector<8x128xf32> -> vector<8x128xf32>
    %c0_194 = arith.constant 0 : index
    %c0_195 = arith.constant 0 : index
    %489 = vector.load %arg7[%c0_194, %c0_195] : memref<32x128xbf16, #tpu.memory_space<vmem>>, vector<32x128xbf16>
    %cst_196 = arith.constant dense<0.000000e+00> : vector<8x128xf32>
    %490 = tpu.matmul %457, %489, %cst_196 {dimension_numbers = #tpu.dot_dimension_numbers<[1], [0], [0], [1], [0, 0, 1, 1], [], []>} : vector<8x32xbf16>, vector<32x128xbf16>, vector<8x128xf32> -> vector<8x128xf32>
    %491 = arith.addf %488, %490 : vector<8x128xf32>
    %492 = arith.addf %491, %33 : vector<8x128xf32>
    %cst_197 = arith.constant 5.000000e-01 : f32
    %493 = vector.broadcast %cst_197 : f32 to vector<8x128xf32>
    %494 = arith.mulf %493, %492 : vector<8x128xf32>
    %495 = math.tanh %494 : vector<8x128xf32>
    %496 = vector.extract_strided_slice %495 {offsets = [0, 0], sizes = [8, 32], strides = [1, 1]} : vector<8x128xf32> to vector<8x32xf32>
    %cst_198 = arith.constant 5.000000e-01 : f32
    %497 = vector.broadcast %cst_198 : f32 to vector<8x32xf32>
    %498 = arith.mulf %497, %496 : vector<8x32xf32>
    %cst_199 = arith.constant 5.000000e-01 : f32
    %499 = vector.broadcast %cst_199 : f32 to vector<8x32xf32>
    %500 = arith.addf %498, %499 : vector<8x32xf32>
    %501 = vector.extract_strided_slice %495 {offsets = [0, 32], sizes = [8, 32], strides = [1, 1]} : vector<8x128xf32> to vector<8x32xf32>
    %cst_200 = arith.constant 5.000000e-01 : f32
    %502 = vector.broadcast %cst_200 : f32 to vector<8x32xf32>
    %503 = arith.mulf %502, %501 : vector<8x32xf32>
    %cst_201 = arith.constant 5.000000e-01 : f32
    %504 = vector.broadcast %cst_201 : f32 to vector<8x32xf32>
    %505 = arith.addf %503, %504 : vector<8x32xf32>
    %506 = vector.extract_strided_slice %495 {offsets = [0, 64], sizes = [8, 32], strides = [1, 1]} : vector<8x128xf32> to vector<8x32xf32>
    %cst_202 = arith.constant 5.000000e-01 : f32
    %507 = vector.broadcast %cst_202 : f32 to vector<8x32xf32>
    %508 = arith.mulf %507, %506 : vector<8x32xf32>
    %cst_203 = arith.constant 5.000000e-01 : f32
    %509 = vector.broadcast %cst_203 : f32 to vector<8x32xf32>
    %510 = arith.addf %508, %509 : vector<8x32xf32>
    %511 = vector.extract_strided_slice %495 {offsets = [0, 96], sizes = [8, 32], strides = [1, 1]} : vector<8x128xf32> to vector<8x32xf32>
    %512 = arith.mulf %505, %454 : vector<8x32xf32>
    %513 = arith.mulf %500, %511 : vector<8x32xf32>
    %514 = arith.addf %512, %513 : vector<8x32xf32>
    %515 = math.tanh %514 : vector<8x32xf32>
    %516 = arith.mulf %510, %515 : vector<8x32xf32>
    %517 = arith.truncf %516 : vector<8x32xf32> to vector<8x32xbf16>
    %cst_204 = arith.constant 0.000000e+00 : bf16
    %518 = vector.broadcast %cst_204 : bf16 to vector<8x32xbf16>
    %519 = arith.maximumf %517, %518 : vector<8x32xbf16>
    %c0_205 = arith.constant 0 : index
    %c0_206 = arith.constant 0 : index
    %520 = vector.load %arg9[%c0_205, %c0_206] : memref<32x128xbf16, #tpu.memory_space<vmem>>, vector<32x128xbf16>
    %cst_207 = arith.constant dense<0.000000e+00> : vector<8x128xf32>
    %521 = tpu.matmul %519, %520, %cst_207 {dimension_numbers = #tpu.dot_dimension_numbers<[1], [0], [0], [1], [0, 0, 1, 1], [], []>} : vector<8x32xbf16>, vector<32x128xbf16>, vector<8x128xf32> -> vector<8x128xf32>
    %c0_208 = arith.constant 0 : index
    %c0_209 = arith.constant 0 : index
    %522 = vector.load %arg10[%c0_208, %c0_209] : memref<1x128xf32, #tpu.memory_space<vmem>>, vector<1x128xf32>
    %523 = vector.broadcast %522 : vector<1x128xf32> to vector<8x128xf32>
    %524 = arith.addf %521, %523 : vector<8x128xf32>
    %c0_210 = arith.constant 0 : index
    %c0_211 = arith.constant 0 : index
    %525 = vector.load %arg11[%c0_210, %c0_211] : memref<8x128xf32, #tpu.memory_space<vmem>>, vector<8x128xf32>
    tpu.vector_store %arg11[%c0_210, %c0_211], %524 {strides = array<i32>} : memref<8x128xf32, #tpu.memory_space<vmem>>, vector<8x128xf32>,
    return
  }
}

</mosaic_0001>

<llo_original>
// kernel: lstm_forward.1
$region0: #{lstm_forward.1}
  #allocation0 [shape = 'u32[]', space=smem, size = 0x4, offset = 0x4, fixed_abs, tag = 'smem constant byte address 0x4 - core index']
  #allocation1 [shape = 'u32[144,128]{1,0:T(1,128)}', space=vmem, size = 0x12000, scoped, tag = 'internal scratch']
  %s0 = inlined_call_operand.vmem [shape: f32[64,32], index: 0, kind: input, shape index: {}]
  %s1 = inlined_call_operand.vmem [shape: f32[1,32], index: 1, kind: input, shape index: {}]
  %s2 = inlined_call_operand.vmem [shape: f32[1,32], index: 2, kind: input, shape index: {}]
  %s3 = inlined_call_operand.vmem [shape: bf16[32,128], index: 3, kind: input, shape index: {}]
  %s4 = inlined_call_operand.vmem [shape: bf16[32,128], index: 4, kind: input, shape index: {}]
  %s5 = inlined_call_operand.vmem [shape: f32[1,128], index: 5, kind: input, shape index: {}]
  %s6 = inlined_call_operand.vmem [shape: bf16[32,128], index: 6, kind: input, shape index: {}]
  %s7 = inlined_call_operand.vmem [shape: bf16[32,128], index: 7, kind: input, shape index: {}]
  %s8 = inlined_call_operand.vmem [shape: f32[1,128], index: 8, kind: input, shape index: {}]
  %s9 = inlined_call_operand.vmem [shape: bf16[32,128], index: 9, kind: input, shape index: {}]
  %s10 = inlined_call_operand.vmem [shape: f32[1,128], index: 10, kind: input, shape index: {}]
  %s11 = inlined_call_operand.vmem [shape: f32[8,128], index: 11, kind: output, shape index: {}]
  %s12 = sld [smem:[#allocation0]]
  $region54: #{lstm_forward.1} parent=0
    _
  %s14 = ssub.s32 1, %s12
  %s15 = scalar_select 0, %s14, %s12
  // Predicated region
  $region2: #{lstm_forward.1} parent=0 // pred_check
    _
  $region3: #{lstm_forward.1} parent=0 // pred_check_branch
    %17 = sbr.rel (0) target = $region5
  $region4: #{lstm_forward.1} parent=0 // pred_region
    _
  $region5: #{lstm_forward.1} parent=0 // pred_fallthru
    _
  // Predicated region
  $region6: #{lstm_forward.1} parent=0 // pred_check
    _
  $region7: #{lstm_forward.1} parent=0 // pred_check_branch
    %19 = sbr.rel (0) target = $region9
  $region8: #{lstm_forward.1} parent=0 // pred_region
    _
  $region9: #{lstm_forward.1} parent=0 // pred_fallthru
    _
  // Predicated region
  $region10: #{lstm_forward.1} parent=0 // pred_check
    _
  $region11: #{lstm_forward.1} parent=0 // pred_check_branch
    %21 = sbr.rel (0) target = $region13
  $region12: #{lstm_forward.1} parent=0 // pred_region
    _
  $region13: #{lstm_forward.1} parent=0 // pred_fallthru
    _
  // Predicated region
  $region14: #{lstm_forward.1} parent=0 // pred_check
    _
  $region15: #{lstm_forward.1} parent=0 // pred_check_branch
    %23 = sbr.rel (0) target = $region17
  $region16: #{lstm_forward.1} parent=0 // pred_region
    _
  $region17: #{lstm_forward.1} parent=0 // pred_fallthru
    _
  // Predicated region
  $region18: #{lstm_forward.1} parent=0 // pred_check
    _
  $region19: #{lstm_forward.1} parent=0 // pred_check_branch
    %25 = sbr.rel (0) target = $region21
  $region20: #{lstm_forward.1} parent=0 // pred_region
    _
  $region21: #{lstm_forward.1} parent=0 // pred_fallthru
    _
  // Predicated region
  $region22: #{lstm_forward.1} parent=0 // pred_check
    _
  $region23: #{lstm_forward.1} parent=0 // pred_check_branch
    %27 = sbr.rel (0) target = $region25
  $region24: #{lstm_forward.1} parent=0 // pred_region
    _
  $region25: #{lstm_forward.1} parent=0 // pred_fallthru
    _
  // Predicated region
  $region26: #{lstm_forward.1} parent=0 // pred_check
    _
  $region27: #{lstm_forward.1} parent=0 // pred_check_branch
    %29 = sbr.rel (0) target = $region29
  $region28: #{lstm_forward.1} parent=0 // pred_region
    _
  $region29: #{lstm_forward.1} parent=0 // pred_fallthru
    _
  // Predicated region
  $region30: #{lstm_forward.1} parent=0 // pred_check
    _
  $region31: #{lstm_forward.1} parent=0 // pred_check_branch
    %31 = sbr.rel (0) target = $region33
  $region32: #{lstm_forward.1} parent=0 // pred_region
    _
  $region33: #{lstm_forward.1} parent=0 // pred_fallthru
    _
  // Predicated region
  $region34: #{lstm_forward.1} parent=0 // pred_check
    _
  $region35: #{lstm_forward.1} parent=0 // pred_check_branch
    %33 = sbr.rel (0) target = $region37
  $region36: #{lstm_forward.1} parent=0 // pred_region
    _
  $region37: #{lstm_forward.1} parent=0 // pred_fallthru
    _
  // Predicated region
  $region38: #{lstm_forward.1} parent=0 // pred_check
    _
  $region39: #{lstm_forward.1} parent=0 // pred_check_branch
    %35 = sbr.rel (0) target = $region41
  $region40: #{lstm_forward.1} parent=0 // pred_region
    _
  $region41: #{lstm_forward.1} parent=0 // pred_fallthru
    _
  // Predicated region
  $region42: #{lstm_forward.1} parent=0 // pred_check
    _
  $region43: #{lstm_forward.1} parent=0 // pred_check_branch
    %37 = sbr.rel (0) target = $region45
  $region44: #{lstm_forward.1} parent=0 // pred_region
    _
  $region45: #{lstm_forward.1} parent=0 // pred_fallthru
    _
  %v39 = vld [vmem:[%s0] sm:$0xff]
  %v40 = vld [vmem:[%s0 + $0x8] sm:$0xff]
  %v41 = vld [vmem:[%s0 + $0x10] sm:$0xff]
  %v42 = vld [vmem:[%s0 + $0x18] sm:$0xff]
  %v43 = vld [vmem:[%s0 + $0x20] sm:$0xff]
  %v44 = vld [vmem:[%s0 + $0x28] sm:$0xff]
  %v45 = vld [vmem:[%s0 + $0x30] sm:$0xff]
  %v46 = vld [vmem:[%s0 + $0x38] sm:$0xff]
  %vm47 = vcmask 261120
  %v48 = vsel %vm47, %v39, 0.0
  %49 = vadd.xlane.f32.xlu0 %v48
  %v50 = vpop.xlane.xlu0 %49
  %v51 = vsel %vm47, %v40, 0.0
  %52 = vadd.xlane.f32.xlu0 %v51
  %v53 = vpop.xlane.xlu0 %52
  %v54 = vsel %vm47, %v41, 0.0
  %55 = vadd.xlane.f32.xlu0 %v54
  %v56 = vpop.xlane.xlu0 %55
  %v57 = vsel %vm47, %v42, 0.0
  %58 = vadd.xlane.f32.xlu0 %v57
  %v59 = vpop.xlane.xlu0 %58
  %v60 = vsel %vm47, %v43, 0.0
  %61 = vadd.xlane.f32.xlu0 %v60
  %v62 = vpop.xlane.xlu0 %61
  %v63 = vsel %vm47, %v44, 0.0
  %64 = vadd.xlane.f32.xlu0 %v63
  %v65 = vpop.xlane.xlu0 %64
  %v66 = vsel %vm47, %v45, 0.0
  %67 = vadd.xlane.f32.xlu0 %v66
  %v68 = vpop.xlane.xlu0 %67
  %v69 = vsel %vm47, %v46, 0.0
  %70 = vadd.xlane.f32.xlu0 %v69
  %v71 = vpop.xlane.xlu0 %70
  %v72 = vrcp.pop 32.0
  %v73 = vmul.f32 %v50, %v72
  %v74 = vmul.f32 %v53, %v72
  %v75 = vmul.f32 %v56, %v72
  %v76 = vmul.f32 %v59, %v72
  %v77 = vmul.f32 %v62, %v72
  %v78 = vmul.f32 %v65, %v72
  %v79 = vmul.f32 %v68, %v72
  %v80 = vmul.f32 %v71, %v72
  %v81 = vsub.f32 %v39, %v73
  %v82 = vsub.f32 %v40, %v74
  %v83 = vsub.f32 %v41, %v75
  %v84 = vsub.f32 %v42, %v76
  %v85 = vsub.f32 %v43, %v77
  %v86 = vsub.f32 %v44, %v78
  %v87 = vsub.f32 %v45, %v79
  %v88 = vsub.f32 %v46, %v80
  %v89 = vmul.f32 %v81, %v81
  %v90 = vmul.f32 %v82, %v82
  %v91 = vmul.f32 %v83, %v83
  %v92 = vmul.f32 %v84, %v84
  %v93 = vmul.f32 %v85, %v85
  %v94 = vmul.f32 %v86, %v86
  %v95 = vmul.f32 %v87, %v87
  %v96 = vmul.f32 %v88, %v88
  %v97 = vsel %vm47, %v89, 0.0
  %98 = vadd.xlane.f32.xlu0 %v97
  %v99 = vpop.xlane.xlu0 %98
  %v100 = vsel %vm47, %v90, 0.0
  %101 = vadd.xlane.f32.xlu0 %v100
  %v102 = vpop.xlane.xlu0 %101
  %v103 = vsel %vm47, %v91, 0.0
  %104 = vadd.xlane.f32.xlu0 %v103
  %v105 = vpop.xlane.xlu0 %104
  %v106 = vsel %vm47, %v92, 0.0
  %107 = vadd.xlane.f32.xlu0 %v106
  %v108 = vpop.xlane.xlu0 %107
  %v109 = vsel %vm47, %v93, 0.0
  %110 = vadd.xlane.f32.xlu0 %v109
  %v111 = vpop.xlane.xlu0 %110
  %v112 = vsel %vm47, %v94, 0.0
  %113 = vadd.xlane.f32.xlu0 %v112
  %v114 = vpop.xlane.xlu0 %113
  %v115 = vsel %vm47, %v95, 0.0
  %116 = vadd.xlane.f32.xlu0 %v115
  %v117 = vpop.xlane.xlu0 %116
  %v118 = vsel %vm47, %v96, 0.0
  %119 = vadd.xlane.f32.xlu0 %v118
  %v120 = vpop.xlane.xlu0 %119
  %v121 = vmul.f32 %v99, %v72
  %v122 = vmul.f32 %v102, %v72
  %v123 = vmul.f32 %v105, %v72
  %v124 = vmul.f32 %v108, %v72
  %v125 = vmul.f32 %v111, %v72
  %v126 = vmul.f32 %v114, %v72
  %v127 = vmul.f32 %v117, %v72
  %v128 = vmul.f32 %v120, %v72
  %v129 = vadd.f32 %v121, 1e-05
  %v130 = vadd.f32 %v122, 1e-05
  %v131 = vadd.f32 %v123, 1e-05
  %v132 = vadd.f32 %v124, 1e-05
  %v133 = vadd.f32 %v125, 1e-05
  %v134 = vadd.f32 %v126, 1e-05
  %v135 = vadd.f32 %v127, 1e-05
  %v136 = vadd.f32 %v128, 1e-05
  %v137 = vrsqrt.pop %v129
  %v138 = vrsqrt.pop %v130
  %v139 = vrsqrt.pop %v131
  %v140 = vrsqrt.pop %v132
  %v141 = vrsqrt.pop %v133
  %v142 = vrsqrt.pop %v134
  %v143 = vrsqrt.pop %v135
  %v144 = vrsqrt.pop %v136
  %v145 = vmul.f32 %v81, %v137
  %v146 = vmul.f32 %v82, %v138
  %v147 = vmul.f32 %v83, %v139
  %v148 = vmul.f32 %v84, %v140
  %v149 = vmul.f32 %v85, %v141
  %v150 = vmul.f32 %v86, %v142
  %v151 = vmul.f32 %v87, %v143
  %v152 = vmul.f32 %v88, %v144
  %v153 = vld [vmem:[%s1] sm:$0x1]
  %v155 = vlaneseq
  %v156 = vshrl.u32 %v155, 7
  %v157 = vsub.s32 0, %v156
  %v158 = vrot.slane %v153, %v157
  %v160 = vmul.f32 %v145, %v158
  %v161 = vmul.f32 %v146, %v158
  %v162 = vmul.f32 %v147, %v158
  %v163 = vmul.f32 %v148, %v158
  %v164 = vmul.f32 %v149, %v158
  %v165 = vmul.f32 %v150, %v158
  %v166 = vmul.f32 %v151, %v158
  %v167 = vmul.f32 %v152, %v158
  %v168 = vld [vmem:[%s2] sm:$0x1]
  %v170 = vlaneseq
  %v171 = vshrl.u32 %v170, 7
  %v172 = vsub.s32 0, %v171
  %v173 = vrot.slane %v168, %v172
  %v175 = vadd.f32 %v160, %v173
  %v176 = vadd.f32 %v161, %v173
  %v177 = vadd.f32 %v162, %v173
  %v178 = vadd.f32 %v163, %v173
  %v179 = vadd.f32 %v164, %v173
  %v180 = vadd.f32 %v165, %v173
  %v181 = vadd.f32 %v166, %v173
  %v182 = vadd.f32 %v167, %v173
  %v183 = vpack.c.bf16 %v176, %v175
  %v184 = vpack.c.bf16 %v178, %v177
  %v185 = vpack.c.bf16 %v180, %v179
  %v186 = vpack.c.bf16 %v182, %v181
  %v187 = vld [vmem:[%s3] sm:$0xf]
  %v188 = vld [vmem:[%s3 + $0x4] sm:$0xf]
  %v189 = vld [vmem:[%s3 + $0x8] sm:$0xf]
  %v190 = vld [vmem:[%s3 + $0xc] sm:$0xf]
  %v191 = vld [vmem:[%s5] sm:$0x1]
  %v193 = vlaneseq
  %v194 = vshrl.u32 %v193, 7
  %v195 = vsub.s32 0, %v194
  %v196 = vrot.slane %v191, %v195
  %v202 = vunpack.c.l.b16 %v187
  %v203 = vunpack.c.l.b16 %v188
  %v204 = vunpack.c.l.b16 %v189
  %v205 = vunpack.c.l.b16 %v190
  %v206 = vpack.c.b16 %v203, %v202
  %v207 = vpack.c.b16 %v205, %v204
  %v211 = vsel %vm47, %v183, 0
  %v214 = vsel %vm47, %v184, 0
  %v217 = vsel %vm47, %v185, 0
  %v220 = vsel %vm47, %v186, 0
  %222 = vmatprep.subr.bf16.mxu0 0
  %223 = vmatpush1.bf16.msra.mxu0 %v206
  %224 = vmatprep.subr.bf16.mxu0 0
  %225 = vmatpush1.bf16.msra.mxu0 %v207
  %226 = vmatprep.subr.bf16.mxu0 0
  %227 = vmatpush1.bf16.msra.mxu0 0
  %228 = vmatprep.subr.bf16.mxu0 0
  %229 = vmatpush1.bf16.msra.mxu0 0
  %230 = vmatprep.subr.bf16.mxu0 0
  %231 = vmatpush1.bf16.msra.mxu0 0
  %232 = vmatprep.subr.bf16.mxu0 0
  %233 = vmatpush1.bf16.msra.mxu0 0
  %234 = vmatprep.subr.bf16.mxu0 0
  %235 = vmatpush1.bf16.msra.mxu0 0
  %236 = vmatprep.subr.bf16.mxu0 0
  %237 = vmatpush1.bf16.msra.mxu0 0
  %238 = vmatprep.subr.bf16.mxu0 0
  %239 = vmatpush1.bf16.msra.mxu0 0
  %240 = vmatprep.subr.bf16.mxu0 0
  %241 = vmatpush1.bf16.msra.mxu0 0
  %242 = vmatprep.subr.bf16.mxu0 0
  %243 = vmatpush1.bf16.msra.mxu0 0
  %244 = vmatprep.subr.bf16.mxu0 0
  %245 = vmatpush1.bf16.msra.mxu0 0
  %246 = vmatprep.subr.bf16.mxu0 0
  %247 = vmatpush1.bf16.msra.mxu0 0
  %248 = vmatprep.subr.bf16.mxu0 0
  %249 = vmatpush1.bf16.msra.mxu0 0
  %250 = vmatprep.subr.bf16.mxu0 0
  %251 = vmatpush1.bf16.msra.mxu0 0
  %252 = vmatprep.subr.bf16.mxu0 0
  %253 = vmatpush1.bf16.msra.mxu0 0
  %254 = vmatprep.mubr.bf16.mxu0 0
  %255 = vmatmul.mubr.bf16.gmra.mrb[0].mxu0 %v211
  %v256 = vpop.f32.mrb[0].mxu0
  %v257 = vadd.f32 %v196, %v256
  %v258 = vpop.f32.mrb[0].mxu0
  %v259 = vpop.f32.mrb[0].mxu0
  %v260 = vadd.f32 %v196, %v259
  %v261 = vpop.f32.mrb[0].mxu0
  %262 = vmatprep.mubr.bf16.mxu0 0
  %263 = vmatmul.mubr.bf16.gmra.mrb[0].mxu0 %v214
  %v264 = vpop.f32.mrb[0].mxu0
  %v265 = vadd.f32 %v196, %v264
  %v266 = vpop.f32.mrb[0].mxu0
  %v267 = vpop.f32.mrb[0].mxu0
  %v268 = vadd.f32 %v196, %v267
  %v269 = vpop.f32.mrb[0].mxu0
  %270 = vmatprep.mubr.bf16.mxu0 0
  %271 = vmatmul.mubr.bf16.gmra.mrb[0].mxu0 %v217
  %v272 = vpop.f32.mrb[0].mxu0
  %v273 = vadd.f32 %v196, %v272
  %v274 = vpop.f32.mrb[0].mxu0
  %v275 = vpop.f32.mrb[0].mxu0
  %v276 = vadd.f32 %v196, %v275
  %v277 = vpop.f32.mrb[0].mxu0
  %278 = vmatprep.mubr.bf16.mxu0 0
  %279 = vmatmul.mubr.bf16.gmra.mrb[0].mxu0 %v220
  %v280 = vpop.f32.mrb[0].mxu0
  %v281 = vadd.f32 %v196, %v280
  %v282 = vpop.f32.mrb[0].mxu0
  %v283 = vpop.f32.mrb[0].mxu0
  %v284 = vadd.f32 %v196, %v283
  %v285 = vpop.f32.mrb[0].mxu0
  %286 = vdwg.mxu0
  %v287 = vld [vmem:[%s8] sm:$0x1]
  %v289 = vlaneseq
  %v290 = vshrl.u32 %v289, 7
  %v291 = vsub.s32 0, %v290
  %v292 = vrot.slane %v287, %v291
  %v294 = vld [vmem:[%s4] sm:$0xf]
  %v295 = vld [vmem:[%s4 + $0x4] sm:$0xf]
  %v296 = vld [vmem:[%s4 + $0x8] sm:$0xf]
  %v297 = vld [vmem:[%s4 + $0xc] sm:$0xf]
  %v302 = vunpack.c.l.b16 %v294
  %v303 = vunpack.c.l.b16 %v295
  %v304 = vunpack.c.l.b16 %v296
  %v305 = vunpack.c.l.b16 %v297
  %v306 = vpack.c.b16 %v303, %v302
  %v307 = vpack.c.b16 %v305, %v304
  %v311 = vsel %vm47, 0, 0
  %313 = vmatprep.subr.bf16.mxu0 0
  %314 = vmatpush1.bf16.msra.mxu0 %v306
  %315 = vmatprep.subr.bf16.mxu0 0
  %316 = vmatpush1.bf16.msra.mxu0 %v307
  %317 = vmatprep.subr.bf16.mxu0 0
  %318 = vmatpush1.bf16.msra.mxu0 0
  %319 = vmatprep.subr.bf16.mxu0 0
  %320 = vmatpush1.bf16.msra.mxu0 0
  %321 = vmatprep.subr.bf16.mxu0 0
  %322 = vmatpush1.bf16.msra.mxu0 0
  %323 = vmatprep.subr.bf16.mxu0 0
  %324 = vmatpush1.bf16.msra.mxu0 0
  %325 = vmatprep.subr.bf16.mxu0 0
  %326 = vmatpush1.bf16.msra.mxu0 0
  %327 = vmatprep.subr.bf16.mxu0 0
  %328 = vmatpush1.bf16.msra.mxu0 0
  %329 = vmatprep.subr.bf16.mxu0 0
  %330 = vmatpush1.bf16.msra.mxu0 0
  %331 = vmatprep.subr.bf16.mxu0 0
  %332 = vmatpush1.bf16.msra.mxu0 0
  %333 = vmatprep.subr.bf16.mxu0 0
  %334 = vmatpush1.bf16.msra.mxu0 0
  %335 = vmatprep.subr.bf16.mxu0 0
  %336 = vmatpush1.bf16.msra.mxu0 0
  %337 = vmatprep.subr.bf16.mxu0 0
  %338 = vmatpush1.bf16.msra.mxu0 0
  %339 = vmatprep.subr.bf16.mxu0 0
  %340 = vmatpush1.bf16.msra.mxu0 0
  %341 = vmatprep.subr.bf16.mxu0 0
  %342 = vmatpush1.bf16.msra.mxu0 0
  %343 = vmatprep.subr.bf16.mxu0 0
  %344 = vmatpush1.bf16.msra.mxu0 0
  %345 = vmatprep.mubr.bf16.mxu0 0
  %346 = vmatmul.mubr.bf16.gmra.mrb[0].mxu0 %v311
  %v347 = vpop.f32.mrb[0].mxu0
  %v348 = vadd.f32 0.0, %v347
  %v349 = vpop.f32.mrb[0].mxu0
  %v350 = vpop.f32.mrb[0].mxu0
  %v351 = vpop.f32.mrb[0].mxu0
  %352 = vdwg.mxu0
  %v353 = vadd.f32 %v257, %v348
  %v354 = vmul.f32 %v353, 0.5
  %v355 = vtanh.pop %v354
  %v356 = vmul.f32 %v355, 0.5
  %v357 = vadd.f32 %v356, 0.5
  %v358 = vmul.f32 %v357, 0.0
  %360 = vrot.lane.b32.xlu0 %v355, 32
  %v361 = vpop.permute.xlu0 %360
  %v363 = vmul.f32 %v357, %v361
  %365 = vrot.lane.b32.xlu0 %v363, 32
  %v366 = vpop.permute.xlu0 %365
  %v368 = vadd.f32 %v358, %v366
  %v369 = vtanh.pop %v368
  %371 = vrot.lane.b32.xlu0 %v369, 32
  %v372 = vpop.permute.xlu0 %371
  %v374 = vmul.f32 %v357, %v372
  %v375 = vpack.c.bf16 %v374, %v374
  %v376 = vld [vmem:[%s6] sm:$0xf]
  %v377 = vld [vmem:[%s6 + $0x4] sm:$0xf]
  %v378 = vld [vmem:[%s6 + $0x8] sm:$0xf]
  %v379 = vld [vmem:[%s6 + $0xc] sm:$0xf]
  %v380 = vld [vmem:[%s7] sm:$0xf]
  %v381 = vld [vmem:[%s7 + $0x4] sm:$0xf]
  %v382 = vld [vmem:[%s7 + $0x8] sm:$0xf]
  %v383 = vld [vmem:[%s7 + $0xc] sm:$0xf]
  %v388 = vunpack.c.l.b16 %v380
  %v389 = vunpack.c.l.b16 %v381
  %v390 = vunpack.c.l.b16 %v382
  %v391 = vunpack.c.l.b16 %v383
  %v392 = vpack.c.b16 %v389, %v388
  %v393 = vpack.c.b16 %v391, %v390
  %396 = vmatprep.subr.bf16.mxu0 0
  %397 = vmatpush1.bf16.msra.mxu0 %v392
  %398 = vmatprep.subr.bf16.mxu0 0
  %399 = vmatpush1.bf16.msra.mxu0 %v393
  %400 = vmatprep.subr.bf16.mxu0 0
  %401 = vmatpush1.bf16.msra.mxu0 0
  %402 = vmatprep.subr.bf16.mxu0 0
  %403 = vmatpush1.bf16.msra.mxu0 0
  %404 = vmatprep.subr.bf16.mxu0 0
  %405 = vmatpush1.bf16.msra.mxu0 0
  %406 = vmatprep.subr.bf16.mxu0 0
  %407 = vmatpush1.bf16.msra.mxu0 0
  %408 = vmatprep.subr.bf16.mxu0 0
  %409 = vmatpush1.bf16.msra.mxu0 0
  %410 = vmatprep.subr.bf16.mxu0 0
  %411 = vmatpush1.bf16.msra.mxu0 0
  %412 = vmatprep.subr.bf16.mxu0 0
  %413 = vmatpush1.bf16.msra.mxu0 0
  %414 = vmatprep.subr.bf16.mxu0 0
  %415 = vmatpush1.bf16.msra.mxu0 0
  %416 = vmatprep.subr.bf16.mxu0 0
  %417 = vmatpush1.bf16.msra.mxu0 0
  %418 = vmatprep.subr.bf16.mxu0 0
  %419 = vmatpush1.bf16.msra.mxu0 0
  %420 = vmatprep.subr.bf16.mxu0 0
  %421 = vmatpush1.bf16.msra.mxu0 0
  %422 = vmatprep.subr.bf16.mxu0 0
  %423 = vmatpush1.bf16.msra.mxu0 0
  %424 = vmatprep.subr.bf16.mxu0 0
  %425 = vmatpush1.bf16.msra.mxu0 0
  %426 = vmatprep.subr.bf16.mxu0 0
  %427 = vmatpush1.bf16.msra.mxu0 0
  %428 = vmatprep.mubr.bf16.mxu0 0
  %429 = vmatmul.mubr.bf16.gmra.mrb[0].mxu0 %v311
  %v430 = vpop.f32.mrb[0].mxu0
  %v431 = vadd.f32 0.0, %v430
  %v432 = vpop.f32.mrb[0].mxu0
  %v433 = vpop.f32.mrb[0].mxu0
  %v434 = vpop.f32.mrb[0].mxu0
  %435 = vdwg.mxu0
  %437 = vrot.lane.b32.xlu0 %v375, 64
  %v438 = vpop.permute.xlu0 %437
  %v443 = vunpack.c.l.b16 %v376
  %v444 = vunpack.c.l.b16 %v377
  %v445 = vunpack.c.l.b16 %v378
  %v446 = vunpack.c.l.b16 %v379
  %v447 = vpack.c.b16 %v444, %v443
  %v448 = vpack.c.b16 %v446, %v445
  %v452 = vsel %vm47, %v438, 0
  %454 = vmatprep.subr.bf16.mxu0 0
  %455 = vmatpush1.bf16.msra.mxu0 %v447
  %456 = vmatprep.subr.bf16.mxu0 0
  %457 = vmatpush1.bf16.msra.mxu0 %v448
  %458 = vmatprep.subr.bf16.mxu0 0
  %459 = vmatpush1.bf16.msra.mxu0 0
  %460 = vmatprep.subr.bf16.mxu0 0
  %461 = vmatpush1.bf16.msra.mxu0 0
  %462 = vmatprep.subr.bf16.mxu0 0
  %463 = vmatpush1.bf16.msra.mxu0 0
  %464 = vmatprep.subr.bf16.mxu0 0
  %465 = vmatpush1.bf16.msra.mxu0 0
  %466 = vmatprep.subr.bf16.mxu0 0
  %467 = vmatpush1.bf16.msra.mxu0 0
  %468 = vmatprep.subr.bf16.mxu0 0
  %469 = vmatpush1.bf16.msra.mxu0 0
  %470 = vmatprep.subr.bf16.mxu0 0
  %471 = vmatpush1.bf16.msra.mxu0 0
  %472 = vmatprep.subr.bf16.mxu0 0
  %473 = vmatpush1.bf16.msra.mxu0 0
  %474 = vmatprep.subr.bf16.mxu0 0
  %475 = vmatpush1.bf16.msra.mxu0 0
  %476 = vmatprep.subr.bf16.mxu0 0
  %477 = vmatpush1.bf16.msra.mxu0 0
  %478 = vmatprep.subr.bf16.mxu0 0
  %479 = vmatpush1.bf16.msra.mxu0 0
  %480 = vmatprep.subr.bf16.mxu0 0
  %481 = vmatpush1.bf16.msra.mxu0 0
  %482 = vmatprep.subr.bf16.mxu0 0
  %483 = vmatpush1.bf16.msra.mxu0 0
  %484 = vmatprep.subr.bf16.mxu0 0
  %485 = vmatpush1.bf16.msra.mxu0 0
  %486 = vmatprep.mubr.bf16.mxu0 0
  %487 = vmatmul.mubr.bf16.gmra.mrb[0].mxu0 %v452
  %v488 = vpop.f32.mrb[0].mxu0
  %v489 = vadd.f32 %v431, %v488
  %v490 = vpop.f32.mrb[0].mxu0
  %v491 = vpop.f32.mrb[0].mxu0
  %v492 = vpop.f32.mrb[0].mxu0
  %493 = vdwg.mxu0
  %v494 = vadd.f32 %v489, %v292
  %v495 = vmul.f32 %v494, 0.5
  %v496 = vtanh.pop %v495
  %v497 = vmul.f32 %v496, 0.5
  %v498 = vadd.f32 %v497, 0.5
  %v499 = vmul.f32 %v498, 0.0
  %501 = vrot.lane.b32.xlu0 %v496, 32
  %v502 = vpop.permute.xlu0 %501
  %v504 = vmul.f32 %v498, %v502
  %506 = vrot.lane.b32.xlu0 %v504, 32
  %v507 = vpop.permute.xlu0 %506
  %v509 = vadd.f32 %v499, %v507
  %v510 = vtanh.pop %v509
  %512 = vrot.lane.b32.xlu0 %v510, 32
  %v513 = vpop.permute.xlu0 %512
  %v515 = vmul.f32 %v498, %v513
  %v516 = vpack.c.bf16 %v515, %v515
  %517 = vmatprep.subr.bf16.mxu0 0
  %518 = vmatpush1.bf16.msra.mxu0 %v306
  %519 = vmatprep.subr.bf16.mxu0 0
  %520 = vmatpush1.bf16.msra.mxu0 %v307
  %521 = vmatprep.subr.bf16.mxu0 0
  %522 = vmatpush1.bf16.msra.mxu0 0
  %523 = vmatprep.subr.bf16.mxu0 0
  %524 = vmatpush1.bf16.msra.mxu0 0
  %525 = vmatprep.subr.bf16.mxu0 0
  %526 = vmatpush1.bf16.msra.mxu0 0
  %527 = vmatprep.subr.bf16.mxu0 0
  %528 = vmatpush1.bf16.msra.mxu0 0
  %529 = vmatprep.subr.bf16.mxu0 0
  %530 = vmatpush1.bf16.msra.mxu0 0
  %531 = vmatprep.subr.bf16.mxu0 0
  %532 = vmatpush1.bf16.msra.mxu0 0
  %533 = vmatprep.subr.bf16.mxu0 0
  %534 = vmatpush1.bf16.msra.mxu0 0
  %535 = vmatprep.subr.bf16.mxu0 0
  %536 = vmatpush1.bf16.msra.mxu0 0
  %537 = vmatprep.subr.bf16.mxu0 0
  %538 = vmatpush1.bf16.msra.mxu0 0
  %539 = vmatprep.subr.bf16.mxu0 0
  %540 = vmatpush1.bf16.msra.mxu0 0
  %541 = vmatprep.subr.bf16.mxu0 0
  %542 = vmatpush1.bf16.msra.mxu0 0
  %543 = vmatprep.subr.bf16.mxu0 0
  %544 = vmatpush1.bf16.msra.mxu0 0
  %545 = vmatprep.subr.bf16.mxu0 0
  %546 = vmatpush1.bf16.msra.mxu0 0
  %547 = vmatprep.subr.bf16.mxu0 0
  %548 = vmatpush1.bf16.msra.mxu0 0
  %549 = vmatprep.mubr.bf16.mxu0 0
  %550 = vmatmul.mubr.bf16.gmra.mrb[0].mxu0 %v452
  %v551 = vpop.f32.mrb[0].mxu0
  %v552 = vadd.f32 0.0, %v551
  %v553 = vpop.f32.mrb[0].mxu0
  %v554 = vpop.f32.mrb[0].mxu0
  %v555 = vpop.f32.mrb[0].mxu0
  %556 = vdwg.mxu0
  %v557 = vadd.f32 %v260, %v552
  %v558 = vmul.f32 %v557, 0.5
  %v559 = vtanh.pop %v558
  %v560 = vmul.f32 %v559, 0.5
  %v561 = vadd.f32 %v560, 0.5
  %v562 = vmul.f32 %v561, %v368
  %564 = vrot.lane.b32.xlu0 %v559, 32
  %v565 = vpop.permute.xlu0 %564
  %v567 = vmul.f32 %v561, %v565
  %569 = vrot.lane.b32.xlu0 %v567, 32
  %v570 = vpop.permute.xlu0 %569
  %v572 = vadd.f32 %v562, %v570
  %v573 = vtanh.pop %v572
  %575 = vrot.lane.b32.xlu0 %v573, 32
  %v576 = vpop.permute.xlu0 %575
  %v578 = vmul.f32 %v561, %v576
  %v579 = vpack.c.bf16 %v578, %v578
  %581 = vrot.lane.b32.xlu0 %v516, 64
  %v582 = vpop.permute.xlu0 %581
  %v584 = vsel %vm47, %v582, 0
  %586 = vmatprep.subr.bf16.mxu0 0
  %587 = vmatpush1.bf16.msra.mxu0 %v392
  %588 = vmatprep.subr.bf16.mxu0 0
  %589 = vmatpush1.bf16.msra.mxu0 %v393
  %590 = vmatprep.subr.bf16.mxu0 0
  %591 = vmatpush1.bf16.msra.mxu0 0
  %592 = vmatprep.subr.bf16.mxu0 0
  %593 = vmatpush1.bf16.msra.mxu0 0
  %594 = vmatprep.subr.bf16.mxu0 0
  %595 = vmatpush1.bf16.msra.mxu0 0
  %596 = vmatprep.subr.bf16.mxu0 0
  %597 = vmatpush1.bf16.msra.mxu0 0
  %598 = vmatprep.subr.bf16.mxu0 0
  %599 = vmatpush1.bf16.msra.mxu0 0
  %600 = vmatprep.subr.bf16.mxu0 0
  %601 = vmatpush1.bf16.msra.mxu0 0
  %602 = vmatprep.subr.bf16.mxu0 0
  %603 = vmatpush1.bf16.msra.mxu0 0
  %604 = vmatprep.subr.bf16.mxu0 0
  %605 = vmatpush1.bf16.msra.mxu0 0
  %606 = vmatprep.subr.bf16.mxu0 0
  %607 = vmatpush1.bf16.msra.mxu0 0
  %608 = vmatprep.subr.bf16.mxu0 0
  %609 = vmatpush1.bf16.msra.mxu0 0
  %610 = vmatprep.subr.bf16.mxu0 0
  %611 = vmatpush1.bf16.msra.mxu0 0
  %612 = vmatprep.subr.bf16.mxu0 0
  %613 = vmatpush1.bf16.msra.mxu0 0
  %614 = vmatprep.subr.bf16.mxu0 0
  %615 = vmatpush1.bf16.msra.mxu0 0
  %616 = vmatprep.subr.bf16.mxu0 0
  %617 = vmatpush1.bf16.msra.mxu0 0
  %618 = vmatprep.mubr.bf16.mxu0 0
  %619 = vmatmul.mubr.bf16.gmra.mrb[0].mxu0 %v584
  %v620 = vpop.f32.mrb[0].mxu0
  %v621 = vadd.f32 0.0, %v620
  %v622 = vpop.f32.mrb[0].mxu0
  %v623 = vpop.f32.mrb[0].mxu0
  %v624 = vpop.f32.mrb[0].mxu0
  %625 = vdwg.mxu0
  %627 = vrot.lane.b32.xlu0 %v579, 64
  %v628 = vpop.permute.xlu0 %627
  %v630 = vsel %vm47, %v628, 0
  %632 = vmatprep.subr.bf16.mxu0 0
  %633 = vmatpush1.bf16.msra.mxu0 %v447
  %634 = vmatprep.subr.bf16.mxu0 0
  %635 = vmatpush1.bf16.msra.mxu0 %v448
  %636 = vmatprep.subr.bf16.mxu0 0
  %637 = vmatpush1.bf16.msra.mxu0 0
  %638 = vmatprep.subr.bf16.mxu0 0
  %639 = vmatpush1.bf16.msra.mxu0 0
  %640 = vmatprep.subr.bf16.mxu0 0
  %641 = vmatpush1.bf16.msra.mxu0 0
  %642 = vmatprep.subr.bf16.mxu0 0
  %643 = vmatpush1.bf16.msra.mxu0 0
  %644 = vmatprep.subr.bf16.mxu0 0
  %645 = vmatpush1.bf16.msra.mxu0 0
  %646 = vmatprep.subr.bf16.mxu0 0
  %647 = vmatpush1.bf16.msra.mxu0 0
  %648 = vmatprep.subr.bf16.mxu0 0
  %649 = vmatpush1.bf16.msra.mxu0 0
  %650 = vmatprep.subr.bf16.mxu0 0
  %651 = vmatpush1.bf16.msra.mxu0 0
  %652 = vmatprep.subr.bf16.mxu0 0
  %653 = vmatpush1.bf16.msra.mxu0 0
  %654 = vmatprep.subr.bf16.mxu0 0
  %655 = vmatpush1.bf16.msra.mxu0 0
  %656 = vmatprep.subr.bf16.mxu0 0
  %657 = vmatpush1.bf16.msra.mxu0 0
  %658 = vmatprep.subr.bf16.mxu0 0
  %659 = vmatpush1.bf16.msra.mxu0 0
  %660 = vmatprep.subr.bf16.mxu0 0
  %661 = vmatpush1.bf16.msra.mxu0 0
  %662 = vmatprep.subr.bf16.mxu0 0
  %663 = vmatpush1.bf16.msra.mxu0 0
  %664 = vmatprep.mubr.bf16.mxu0 0
  %665 = vmatmul.mubr.bf16.gmra.mrb[0].mxu0 %v630
  %v666 = vpop.f32.mrb[0].mxu0
  %v667 = vadd.f32 %v621, %v666
  %v668 = vpop.f32.mrb[0].mxu0
  %v669 = vpop.f32.mrb[0].mxu0
  %v670 = vpop.f32.mrb[0].mxu0
  %671 = vdwg.mxu0
  %v672 = vadd.f32 %v667, %v292
  %v673 = vmul.f32 %v672, 0.5
  %v674 = vtanh.pop %v673
  %v675 = vmul.f32 %v674, 0.5
  %v676 = vadd.f32 %v675, 0.5
  %v677 = vmul.f32 %v676, %v509
  %679 = vrot.lane.b32.xlu0 %v674, 32
  %v680 = vpop.permute.xlu0 %679
  %v682 = vmul.f32 %v676, %v680
  %684 = vrot.lane.b32.xlu0 %v682, 32
  %v685 = vpop.permute.xlu0 %684
  %v687 = vadd.f32 %v677, %v685
  %v688 = vtanh.pop %v687
  %690 = vrot.lane.b32.xlu0 %v688, 32
  %v691 = vpop.permute.xlu0 %690
  %v693 = vmul.f32 %v676, %v691
  %v694 = vpack.c.bf16 %v693, %v693
  %695 = vmatprep.subr.bf16.mxu0 0
  %696 = vmatpush1.bf16.msra.mxu0 %v306
  %697 = vmatprep.subr.bf16.mxu0 0
  %698 = vmatpush1.bf16.msra.mxu0 %v307
  %699 = vmatprep.subr.bf16.mxu0 0
  %700 = vmatpush1.bf16.msra.mxu0 0
  %701 = vmatprep.subr.bf16.mxu0 0
  %702 = vmatpush1.bf16.msra.mxu0 0
  %703 = vmatprep.subr.bf16.mxu0 0
  %704 = vmatpush1.bf16.msra.mxu0 0
  %705 = vmatprep.subr.bf16.mxu0 0
  %706 = vmatpush1.bf16.msra.mxu0 0
  %707 = vmatprep.subr.bf16.mxu0 0
  %708 = vmatpush1.bf16.msra.mxu0 0
  %709 = vmatprep.subr.bf16.mxu0 0
  %710 = vmatpush1.bf16.msra.mxu0 0
  %711 = vmatprep.subr.bf16.mxu0 0
  %712 = vmatpush1.bf16.msra.mxu0 0
  %713 = vmatprep.subr.bf16.mxu0 0
  %714 = vmatpush1.bf16.msra.mxu0 0
  %715 = vmatprep.subr.bf16.mxu0 0
  %716 = vmatpush1.bf16.msra.mxu0 0
  %717 = vmatprep.subr.bf16.mxu0 0
  %718 = vmatpush1.bf16.msra.mxu0 0
  %719 = vmatprep.subr.bf16.mxu0 0
  %720 = vmatpush1.bf16.msra.mxu0 0
  %721 = vmatprep.subr.bf16.mxu0 0
  %722 = vmatpush1.bf16.msra.mxu0 0
  %723 = vmatprep.subr.bf16.mxu0 0
  %724 = vmatpush1.bf16.msra.mxu0 0
  %725 = vmatprep.subr.bf16.mxu0 0
  %726 = vmatpush1.bf16.msra.mxu0 0
  %727 = vmatprep.mubr.bf16.mxu0 0
  %728 = vmatmul.mubr.bf16.gmra.mrb[0].mxu0 %v630
  %v729 = vpop.f32.mrb[0].mxu0
  %v730 = vadd.f32 0.0, %v729
  %v731 = vpop.f32.mrb[0].mxu0
  %v732 = vpop.f32.mrb[0].mxu0
  %v733 = vpop.f32.mrb[0].mxu0
  %734 = vdwg.mxu0
  %v735 = vadd.f32 %v265, %v730
  %v736 = vmul.f32 %v735, 0.5
  %v737 = vtanh.pop %v736
  %v738 = vmul.f32 %v737, 0.5
  %v739 = vadd.f32 %v738, 0.5
  %v740 = vmul.f32 %v739, %v572
  %742 = vrot.lane.b32.xlu0 %v737, 32
  %v743 = vpop.permute.xlu0 %742
  %v745 = vmul.f32 %v739, %v743
  %747 = vrot.lane.b32.xlu0 %v745, 32
  %v748 = vpop.permute.xlu0 %747
  %v750 = vadd.f32 %v740, %v748
  %v751 = vtanh.pop %v750
  %753 = vrot.lane.b32.xlu0 %v751, 32
  %v754 = vpop.permute.xlu0 %753
  %v756 = vmul.f32 %v739, %v754
  %v757 = vpack.c.bf16 %v756, %v756
  %759 = vrot.lane.b32.xlu0 %v694, 64
  %v760 = vpop.permute.xlu0 %759
  %v762 = vsel %vm47, %v760, 0
  %764 = vmatprep.subr.bf16.mxu0 0
  %765 = vmatpush1.bf16.msra.mxu0 %v392
  %766 = vmatprep.subr.bf16.mxu0 0
  %767 = vmatpush1.bf16.msra.mxu0 %v393
  %768 = vmatprep.subr.bf16.mxu0 0
  %769 = vmatpush1.bf16.msra.mxu0 0
  %770 = vmatprep.subr.bf16.mxu0 0
  %771 = vmatpush1.bf16.msra.mxu0 0
  %772 = vmatprep.subr.bf16.mxu0 0
  %773 = vmatpush1.bf16.msra.mxu0 0
  %774 = vmatprep.subr.bf16.mxu0 0
  %775 = vmatpush1.bf16.msra.mxu0 0
  %776 = vmatprep.subr.bf16.mxu0 0
  %777 = vmatpush1.bf16.msra.mxu0 0
  %778 = vmatprep.subr.bf16.mxu0 0
  %779 = vmatpush1.bf16.msra.mxu0 0
  %780 = vmatprep.subr.bf16.mxu0 0
  %781 = vmatpush1.bf16.msra.mxu0 0
  %782 = vmatprep.subr.bf16.mxu0 0
  %783 = vmatpush1.bf16.msra.mxu0 0
  %784 = vmatprep.subr.bf16.mxu0 0
  %785 = vmatpush1.bf16.msra.mxu0 0
  %786 = vmatprep.subr.bf16.mxu0 0
  %787 = vmatpush1.bf16.msra.mxu0 0
  %788 = vmatprep.subr.bf16.mxu0 0
  %789 = vmatpush1.bf16.msra.mxu0 0
  %790 = vmatprep.subr.bf16.mxu0 0
  %791 = vmatpush1.bf16.msra.mxu0 0
  %792 = vmatprep.subr.bf16.mxu0 0
  %793 = vmatpush1.bf16.msra.mxu0 0
  %794 = vmatprep.subr.bf16.mxu0 0
  %795 = vmatpush1.bf16.msra.mxu0 0
  %796 = vmatprep.mubr.bf16.mxu0 0
  %797 = vmatmul.mubr.bf16.gmra.mrb[0].mxu0 %v762
  %v798 = vpop.f32.mrb[0].mxu0
  %v799 = vadd.f32 0.0, %v798
  %v800 = vpop.f32.mrb[0].mxu0
  %v801 = vpop.f32.mrb[0].mxu0
  %v802 = vpop.f32.mrb[0].mxu0
  %803 = vdwg.mxu0
  %805 = vrot.lane.b32.xlu0 %v757, 64
  %v806 = vpop.permute.xlu0 %805
  %v808 = vsel %vm47, %v806, 0
  %810 = vmatprep.subr.bf16.mxu0 0
  %811 = vmatpush1.bf16.msra.mxu0 %v447
  %812 = vmatprep.subr.bf16.mxu0 0
  %813 = vmatpush1.bf16.msra.mxu0 %v448
  %814 = vmatprep.subr.bf16.mxu0 0
  %815 = vmatpush1.bf16.msra.mxu0 0
  %816 = vmatprep.subr.bf16.mxu0 0
  %817 = vmatpush1.bf16.msra.mxu0 0
  %818 = vmatprep.subr.bf16.mxu0 0
  %819 = vmatpush1.bf16.msra.mxu0 0
  %820 = vmatprep.subr.bf16.mxu0 0
  %821 = vmatpush1.bf16.msra.mxu0 0
  %822 = vmatprep.subr.bf16.mxu0 0
  %823 = vmatpush1.bf16.msra.mxu0 0
  %824 = vmatprep.subr.bf16.mxu0 0
  %825 = vmatpush1.bf16.msra.mxu0 0
  %826 = vmatprep.subr.bf16.mxu0 0
  %827 = vmatpush1.bf16.msra.mxu0 0
  %828 = vmatprep.subr.bf16.mxu0 0
  %829 = vmatpush1.bf16.msra.mxu0 0
  %830 = vmatprep.subr.bf16.mxu0 0
  %831 = vmatpush1.bf16.msra.mxu0 0
  %832 = vmatprep.subr.bf16.mxu0 0
  %833 = vmatpush1.bf16.msra.mxu0 0
  %834 = vmatprep.subr.bf16.mxu0 0
  %835 = vmatpush1.bf16.msra.mxu0 0
  %836 = vmatprep.subr.bf16.mxu0 0
  %837 = vmatpush1.bf16.msra.mxu0 0
  %838 = vmatprep.subr.bf16.mxu0 0
  %839 = vmatpush1.bf16.msra.mxu0 0
  %840 = vmatprep.subr.bf16.mxu0 0
  %841 = vmatpush1.bf16.msra.mxu0 0
  %842 = vmatprep.mubr.bf16.mxu0 0
  %843 = vmatmul.mubr.bf16.gmra.mrb[0].mxu0 %v808
  %v844 = vpop.f32.mrb[0].mxu0
  %v845 = vadd.f32 %v799, %v844
  %v846 = vpop.f32.mrb[0].mxu0
  %v847 = vpop.f32.mrb[0].mxu0
  %v848 = vpop.f32.mrb[0].mxu0
  %849 = vdwg.mxu0
  %v850 = vadd.f32 %v845, %v292
  %v851 = vmul.f32 %v850, 0.5
  %v852 = vtanh.pop %v851
  %v853 = vmul.f32 %v852, 0.5
  %v854 = vadd.f32 %v853, 0.5
  %v855 = vmul.f32 %v854, %v687
  %857 = vrot.lane.b32.xlu0 %v852, 32
  %v858 = vpop.permute.xlu0 %857
  %v860 = vmul.f32 %v854, %v858
  %862 = vrot.lane.b32.xlu0 %v860, 32
  %v863 = vpop.permute.xlu0 %862
  %v865 = vadd.f32 %v855, %v863
  %v866 = vtanh.pop %v865
  %868 = vrot.lane.b32.xlu0 %v866, 32
  %v869 = vpop.permute.xlu0 %868
  %v871 = vmul.f32 %v854, %v869
  %v872 = vpack.c.bf16 %v871, %v871
  %873 = vmatprep.subr.bf16.mxu0 0
  %874 = vmatpush1.bf16.msra.mxu0 %v306
  %875 = vmatprep.subr.bf16.mxu0 0
  %876 = vmatpush1.bf16.msra.mxu0 %v307
  %877 = vmatprep.subr.bf16.mxu0 0
  %878 = vmatpush1.bf16.msra.mxu0 0
  %879 = vmatprep.subr.bf16.mxu0 0
  %880 = vmatpush1.bf16.msra.mxu0 0
  %881 = vmatprep.subr.bf16.mxu0 0
  %882 = vmatpush1.bf16.msra.mxu0 0
  %883 = vmatprep.subr.bf16.mxu0 0
  %884 = vmatpush1.bf16.msra.mxu0 0
  %885 = vmatprep.subr.bf16.mxu0 0
  %886 = vmatpush1.bf16.msra.mxu0 0
  %887 = vmatprep.subr.bf16.mxu0 0
  %888 = vmatpush1.bf16.msra.mxu0 0
  %889 = vmatprep.subr.bf16.mxu0 0
  %890 = vmatpush1.bf16.msra.mxu0 0
  %891 = vmatprep.subr.bf16.mxu0 0
  %892 = vmatpush1.bf16.msra.mxu0 0
  %893 = vmatprep.subr.bf16.mxu0 0
  %894 = vmatpush1.bf16.msra.mxu0 0
  %895 = vmatprep.subr.bf16.mxu0 0
  %896 = vmatpush1.bf16.msra.mxu0 0
  %897 = vmatprep.subr.bf16.mxu0 0
  %898 = vmatpush1.bf16.msra.mxu0 0
  %899 = vmatprep.subr.bf16.mxu0 0
  %900 = vmatpush1.bf16.msra.mxu0 0
  %901 = vmatprep.subr.bf16.mxu0 0
  %902 = vmatpush1.bf16.msra.mxu0 0
  %903 = vmatprep.subr.bf16.mxu0 0
  %904 = vmatpush1.bf16.msra.mxu0 0
  %905 = vmatprep.mubr.bf16.mxu0 0
  %906 = vmatmul.mubr.bf16.gmra.mrb[0].mxu0 %v808
  %v907 = vpop.f32.mrb[0].mxu0
  %v908 = vadd.f32 0.0, %v907
  %v909 = vpop.f32.mrb[0].mxu0
  %v910 = vpop.f32.mrb[0].mxu0
  %v911 = vpop.f32.mrb[0].mxu0
  %912 = vdwg.mxu0
  %v913 = vadd.f32 %v268, %v908
  %v914 = vmul.f32 %v913, 0.5
  %v915 = vtanh.pop %v914
  %v916 = vmul.f32 %v915, 0.5
  %v917 = vadd.f32 %v916, 0.5
  %v918 = vmul.f32 %v917, %v750
  %920 = vrot.lane.b32.xlu0 %v915, 32
  %v921 = vpop.permute.xlu0 %920
  %v923 = vmul.f32 %v917, %v921
  %925 = vrot.lane.b32.xlu0 %v923, 32
  %v926 = vpop.permute.xlu0 %925
  %v928 = vadd.f32 %v918, %v926
  %v929 = vtanh.pop %v928
  %931 = vrot.lane.b32.xlu0 %v929, 32
  %v932 = vpop.permute.xlu0 %931
  %v934 = vmul.f32 %v917, %v932
  %v935 = vpack.c.bf16 %v934, %v934
  %937 = vrot.lane.b32.xlu0 %v872, 64
  %v938 = vpop.permute.xlu0 %937
  %v940 = vsel %vm47, %v938, 0
  %942 = vmatprep.subr.bf16.mxu0 0
  %943 = vmatpush1.bf16.msra.mxu0 %v392
  %944 = vmatprep.subr.bf16.mxu0 0
  %945 = vmatpush1.bf16.msra.mxu0 %v393
  %946 = vmatprep.subr.bf16.mxu0 0
  %947 = vmatpush1.bf16.msra.mxu0 0
  %948 = vmatprep.subr.bf16.mxu0 0
  %949 = vmatpush1.bf16.msra.mxu0 0
  %950 = vmatprep.subr.bf16.mxu0 0
  %951 = vmatpush1.bf16.msra.mxu0 0
  %952 = vmatprep.subr.bf16.mxu0 0
  %953 = vmatpush1.bf16.msra.mxu0 0
  %954 = vmatprep.subr.bf16.mxu0 0
  %955 = vmatpush1.bf16.msra.mxu0 0
  %956 = vmatprep.subr.bf16.mxu0 0
  %957 = vmatpush1.bf16.msra.mxu0 0
  %958 = vmatprep.subr.bf16.mxu0 0
  %959 = vmatpush1.bf16.msra.mxu0 0
  %960 = vmatprep.subr.bf16.mxu0 0
  %961 = vmatpush1.bf16.msra.mxu0 0
  %962 = vmatprep.subr.bf16.mxu0 0
  %963 = vmatpush1.bf16.msra.mxu0 0
  %964 = vmatprep.subr.bf16.mxu0 0
  %965 = vmatpush1.bf16.msra.mxu0 0
  %966 = vmatprep.subr.bf16.mxu0 0
  %967 = vmatpush1.bf16.msra.mxu0 0
  %968 = vmatprep.subr.bf16.mxu0 0
  %969 = vmatpush1.bf16.msra.mxu0 0
  %970 = vmatprep.subr.bf16.mxu0 0
  %971 = vmatpush1.bf16.msra.mxu0 0
  %972 = vmatprep.subr.bf16.mxu0 0
  %973 = vmatpush1.bf16.msra.mxu0 0
  %974 = vmatprep.mubr.bf16.mxu0 0
  %975 = vmatmul.mubr.bf16.gmra.mrb[0].mxu0 %v940
  %v976 = vpop.f32.mrb[0].mxu0
  %v977 = vadd.f32 0.0, %v976
  %v978 = vpop.f32.mrb[0].mxu0
  %v979 = vpop.f32.mrb[0].mxu0
  %v980 = vpop.f32.mrb[0].mxu0
  %981 = vdwg.mxu0
  %983 = vrot.lane.b32.xlu0 %v935, 64
  %v984 = vpop.permute.xlu0 %983
  %v986 = vsel %vm47, %v984, 0
  %988 = vmatprep.subr.bf16.mxu0 0
  %989 = vmatpush1.bf16.msra.mxu0 %v447
  %990 = vmatprep.subr.bf16.mxu0 0
  %991 = vmatpush1.bf16.msra.mxu0 %v448
  %992 = vmatprep.subr.bf16.mxu0 0
  %993 = vmatpush1.bf16.msra.mxu0 0
  %994 = vmatprep.subr.bf16.mxu0 0
  %995 = vmatpush1.bf16.msra.mxu0 0
  %996 = vmatprep.subr.bf16.mxu0 0
  %997 = vmatpush1.bf16.msra.mxu0 0
  %998 = vmatprep.subr.bf16.mxu0 0
  %999 = vmatpush1.bf16.msra.mxu0 0
  %1000 = vmatprep.subr.bf16.mxu0 0
  %1001 = vmatpush1.bf16.msra.mxu0 0
  %1002 = vmatprep.subr.bf16.mxu0 0
  %1003 = vmatpush1.bf16.msra.mxu0 0
  %1004 = vmatprep.subr.bf16.mxu0 0
  %1005 = vmatpush1.bf16.msra.mxu0 0
  %1006 = vmatprep.subr.bf16.mxu0 0
  %1007 = vmatpush1.bf16.msra.mxu0 0
  %1008 = vmatprep.subr.bf16.mxu0 0
  %1009 = vmatpush1.bf16.msra.mxu0 0
  %1010 = vmatprep.subr.bf16.mxu0 0
  %1011 = vmatpush1.bf16.msra.mxu0 0
  %1012 = vmatprep.subr.bf16.mxu0 0
  %1013 = vmatpush1.bf16.msra.mxu0 0
  %1014 = vmatprep.subr.bf16.mxu0 0
  %1015 = vmatpush1.bf16.msra.mxu0 0
  %1016 = vmatprep.subr.bf16.mxu0 0
  %1017 = vmatpush1.bf16.msra.mxu0 0
  %1018 = vmatprep.subr.bf16.mxu0 0
  %1019 = vmatpush1.bf16.msra.mxu0 0
  %1020 = vmatprep.mubr.bf16.mxu0 0
  %1021 = vmatmul.mubr.bf16.gmra.mrb[0].mxu0 %v986
  %v1022 = vpop.f32.mrb[0].mxu0
  %v1023 = vadd.f32 %v977, %v1022
  %v1024 = vpop.f32.mrb[0].mxu0
  %v1025 = vpop.f32.mrb[0].mxu0
  %v1026 = vpop.f32.mrb[0].mxu0
  %1027 = vdwg.mxu0
  %v1028 = vadd.f32 %v1023, %v292
  %v1029 = vmul.f32 %v1028, 0.5
  %v1030 = vtanh.pop %v1029
  %v1031 = vmul.f32 %v1030, 0.5
  %v1032 = vadd.f32 %v1031, 0.5
  %v1033 = vmul.f32 %v1032, %v865
  %1035 = vrot.lane.b32.xlu0 %v1030, 32
  %v1036 = vpop.permute.xlu0 %1035
  %v1038 = vmul.f32 %v1032, %v1036
  %1040 = vrot.lane.b32.xlu0 %v1038, 32
  %v1041 = vpop.permute.xlu0 %1040
  %v1043 = vadd.f32 %v1033, %v1041
  %v1044 = vtanh.pop %v1043
  %1046 = vrot.lane.b32.xlu0 %v1044, 32
  %v1047 = vpop.permute.xlu0 %1046
  %v1049 = vmul.f32 %v1032, %v1047
  %v1050 = vpack.c.bf16 %v1049, %v1049
  %1051 = vmatprep.subr.bf16.mxu0 0
  %1052 = vmatpush1.bf16.msra.mxu0 %v306
  %1053 = vmatprep.subr.bf16.mxu0 0
  %1054 = vmatpush1.bf16.msra.mxu0 %v307
  %1055 = vmatprep.subr.bf16.mxu0 0
  %1056 = vmatpush1.bf16.msra.mxu0 0
  %1057 = vmatprep.subr.bf16.mxu0 0
  %1058 = vmatpush1.bf16.msra.mxu0 0
  %1059 = vmatprep.subr.bf16.mxu0 0
  %1060 = vmatpush1.bf16.msra.mxu0 0
  %1061 = vmatprep.subr.bf16.mxu0 0
  %1062 = vmatpush1.bf16.msra.mxu0 0
  %1063 = vmatprep.subr.bf16.mxu0 0
  %1064 = vmatpush1.bf16.msra.mxu0 0
  %1065 = vmatprep.subr.bf16.mxu0 0
  %1066 = vmatpush1.bf16.msra.mxu0 0
  %1067 = vmatprep.subr.bf16.mxu0 0
  %1068 = vmatpush1.bf16.msra.mxu0 0
  %1069 = vmatprep.subr.bf16.mxu0 0
  %1070 = vmatpush1.bf16.msra.mxu0 0
  %1071 = vmatprep.subr.bf16.mxu0 0
  %1072 = vmatpush1.bf16.msra.mxu0 0
  %1073 = vmatprep.subr.bf16.mxu0 0
  %1074 = vmatpush1.bf16.msra.mxu0 0
  %1075 = vmatprep.subr.bf16.mxu0 0
  %1076 = vmatpush1.bf16.msra.mxu0 0
  %1077 = vmatprep.subr.bf16.mxu0 0
  %1078 = vmatpush1.bf16.msra.mxu0 0
  %1079 = vmatprep.subr.bf16.mxu0 0
  %1080 = vmatpush1.bf16.msra.mxu0 0
  %1081 = vmatprep.subr.bf16.mxu0 0
  %1082 = vmatpush1.bf16.msra.mxu0 0
  %1083 = vmatprep.mubr.bf16.mxu0 0
  %1084 = vmatmul.mubr.bf16.gmra.mrb[0].mxu0 %v986
  %v1085 = vpop.f32.mrb[0].mxu0
  %v1086 = vadd.f32 0.0, %v1085
  %v1087 = vpop.f32.mrb[0].mxu0
  %v1088 = vpop.f32.mrb[0].mxu0
  %v1089 = vpop.f32.mrb[0].mxu0
  %1090 = vdwg.mxu0
  %v1091 = vadd.f32 %v273, %v1086
  %v1092 = vmul.f32 %v1091, 0.5
  %v1093 = vtanh.pop %v1092
  %v1094 = vmul.f32 %v1093, 0.5
  %v1095 = vadd.f32 %v1094, 0.5
  %v1096 = vmul.f32 %v1095, %v928
  %1098 = vrot.lane.b32.xlu0 %v1093, 32
  %v1099 = vpop.permute.xlu0 %1098
  %v1101 = vmul.f32 %v1095, %v1099
  %1103 = vrot.lane.b32.xlu0 %v1101, 32
  %v1104 = vpop.permute.xlu0 %1103
  %v1106 = vadd.f32 %v1096, %v1104
  %v1107 = vtanh.pop %v1106
  %1109 = vrot.lane.b32.xlu0 %v1107, 32
  %v1110 = vpop.permute.xlu0 %1109
  %v1112 = vmul.f32 %v1095, %v1110
  %v1113 = vpack.c.bf16 %v1112, %v1112
  %1115 = vrot.lane.b32.xlu0 %v1050, 64
  %v1116 = vpop.permute.xlu0 %1115
  %v1118 = vsel %vm47, %v1116, 0
  %1120 = vmatprep.subr.bf16.mxu0 0
  %1121 = vmatpush1.bf16.msra.mxu0 %v392
  %1122 = vmatprep.subr.bf16.mxu0 0
  %1123 = vmatpush1.bf16.msra.mxu0 %v393
  %1124 = vmatprep.subr.bf16.mxu0 0
  %1125 = vmatpush1.bf16.msra.mxu0 0
  %1126 = vmatprep.subr.bf16.mxu0 0
  %1127 = vmatpush1.bf16.msra.mxu0 0
  %1128 = vmatprep.subr.bf16.mxu0 0
  %1129 = vmatpush1.bf16.msra.mxu0 0
  %1130 = vmatprep.subr.bf16.mxu0 0
  %1131 = vmatpush1.bf16.msra.mxu0 0
  %1132 = vmatprep.subr.bf16.mxu0 0
  %1133 = vmatpush1.bf16.msra.mxu0 0
  %1134 = vmatprep.subr.bf16.mxu0 0
  %1135 = vmatpush1.bf16.msra.mxu0 0
  %1136 = vmatprep.subr.bf16.mxu0 0
  %1137 = vmatpush1.bf16.msra.mxu0 0
  %1138 = vmatprep.subr.bf16.mxu0 0
  %1139 = vmatpush1.bf16.msra.mxu0 0
  %1140 = vmatprep.subr.bf16.mxu0 0
  %1141 = vmatpush1.bf16.msra.mxu0 0
  %1142 = vmatprep.subr.bf16.mxu0 0
  %1143 = vmatpush1.bf16.msra.mxu0 0
  %1144 = vmatprep.subr.bf16.mxu0 0
  %1145 = vmatpush1.bf16.msra.mxu0 0
  %1146 = vmatprep.subr.bf16.mxu0 0
  %1147 = vmatpush1.bf16.msra.mxu0 0
  %1148 = vmatprep.subr.bf16.mxu0 0
  %1149 = vmatpush1.bf16.msra.mxu0 0
  %1150 = vmatprep.subr.bf16.mxu0 0
  %1151 = vmatpush1.bf16.msra.mxu0 0
  %1152 = vmatprep.mubr.bf16.mxu0 0
  %1153 = vmatmul.mubr.bf16.gmra.mrb[0].mxu0 %v1118
  %v1154 = vpop.f32.mrb[0].mxu0
  %v1155 = vadd.f32 0.0, %v1154
  %v1156 = vpop.f32.mrb[0].mxu0
  %v1157 = vpop.f32.mrb[0].mxu0
  %v1158 = vpop.f32.mrb[0].mxu0
  %1159 = vdwg.mxu0
  %1161 = vrot.lane.b32.xlu0 %v1113, 64
  %v1162 = vpop.permute.xlu0 %1161
  %v1164 = vsel %vm47, %v1162, 0
  %1166 = vmatprep.subr.bf16.mxu0 0
  %1167 = vmatpush1.bf16.msra.mxu0 %v447
  %1168 = vmatprep.subr.bf16.mxu0 0
  %1169 = vmatpush1.bf16.msra.mxu0 %v448
  %1170 = vmatprep.subr.bf16.mxu0 0
  %1171 = vmatpush1.bf16.msra.mxu0 0
  %1172 = vmatprep.subr.bf16.mxu0 0
  %1173 = vmatpush1.bf16.msra.mxu0 0
  %1174 = vmatprep.subr.bf16.mxu0 0
  %1175 = vmatpush1.bf16.msra.mxu0 0
  %1176 = vmatprep.subr.bf16.mxu0 0
  %1177 = vmatpush1.bf16.msra.mxu0 0
  %1178 = vmatprep.subr.bf16.mxu0 0
  %1179 = vmatpush1.bf16.msra.mxu0 0
  %1180 = vmatprep.subr.bf16.mxu0 0
  %1181 = vmatpush1.bf16.msra.mxu0 0
  %1182 = vmatprep.subr.bf16.mxu0 0
  %1183 = vmatpush1.bf16.msra.mxu0 0
  %1184 = vmatprep.subr.bf16.mxu0 0
  %1185 = vmatpush1.bf16.msra.mxu0 0
  %1186 = vmatprep.subr.bf16.mxu0 0
  %1187 = vmatpush1.bf16.msra.mxu0 0
  %1188 = vmatprep.subr.bf16.mxu0 0
  %1189 = vmatpush1.bf16.msra.mxu0 0
  %1190 = vmatprep.subr.bf16.mxu0 0
  %1191 = vmatpush1.bf16.msra.mxu0 0
  %1192 = vmatprep.subr.bf16.mxu0 0
  %1193 = vmatpush1.bf16.msra.mxu0 0
  %1194 = vmatprep.subr.bf16.mxu0 0
  %1195 = vmatpush1.bf16.msra.mxu0 0
  %1196 = vmatprep.subr.bf16.mxu0 0
  %1197 = vmatpush1.bf16.msra.mxu0 0
  %1198 = vmatprep.mubr.bf16.mxu0 0
  %1199 = vmatmul.mubr.bf16.gmra.mrb[0].mxu0 %v1164
  %v1200 = vpop.f32.mrb[0].mxu0
  %v1201 = vadd.f32 %v1155, %v1200
  %v1202 = vpop.f32.mrb[0].mxu0
  %v1203 = vpop.f32.mrb[0].mxu0
  %v1204 = vpop.f32.mrb[0].mxu0
  %1205 = vdwg.mxu0
  %v1206 = vadd.f32 %v1201, %v292
  %v1207 = vmul.f32 %v1206, 0.5
  %v1208 = vtanh.pop %v1207
  %v1209 = vmul.f32 %v1208, 0.5
  %v1210 = vadd.f32 %v1209, 0.5
  %v1211 = vmul.f32 %v1210, %v1043
  %1213 = vrot.lane.b32.xlu0 %v1208, 32
  %v1214 = vpop.permute.xlu0 %1213
  %v1216 = vmul.f32 %v1210, %v1214
  %1218 = vrot.lane.b32.xlu0 %v1216, 32
  %v1219 = vpop.permute.xlu0 %1218
  %v1221 = vadd.f32 %v1211, %v1219
  %v1222 = vtanh.pop %v1221
  %1224 = vrot.lane.b32.xlu0 %v1222, 32
  %v1225 = vpop.permute.xlu0 %1224
  %v1227 = vmul.f32 %v1210, %v1225
  %v1228 = vpack.c.bf16 %v1227, %v1227
  %1229 = vmatprep.subr.bf16.mxu0 0
  %1230 = vmatpush1.bf16.msra.mxu0 %v306
  %1231 = vmatprep.subr.bf16.mxu0 0
  %1232 = vmatpush1.bf16.msra.mxu0 %v307
  %1233 = vmatprep.subr.bf16.mxu0 0
  %1234 = vmatpush1.bf16.msra.mxu0 0
  %1235 = vmatprep.subr.bf16.mxu0 0
  %1236 = vmatpush1.bf16.msra.mxu0 0
  %1237 = vmatprep.subr.bf16.mxu0 0
  %1238 = vmatpush1.bf16.msra.mxu0 0
  %1239 = vmatprep.subr.bf16.mxu0 0
  %1240 = vmatpush1.bf16.msra.mxu0 0
  %1241 = vmatprep.subr.bf16.mxu0 0
  %1242 = vmatpush1.bf16.msra.mxu0 0
  %1243 = vmatprep.subr.bf16.mxu0 0
  %1244 = vmatpush1.bf16.msra.mxu0 0
  %1245 = vmatprep.subr.bf16.mxu0 0
  %1246 = vmatpush1.bf16.msra.mxu0 0
  %1247 = vmatprep.subr.bf16.mxu0 0
  %1248 = vmatpush1.bf16.msra.mxu0 0
  %1249 = vmatprep.subr.bf16.mxu0 0
  %1250 = vmatpush1.bf16.msra.mxu0 0
  %1251 = vmatprep.subr.bf16.mxu0 0
  %1252 = vmatpush1.bf16.msra.mxu0 0
  %1253 = vmatprep.subr.bf16.mxu0 0
  %1254 = vmatpush1.bf16.msra.mxu0 0
  %1255 = vmatprep.subr.bf16.mxu0 0
  %1256 = vmatpush1.bf16.msra.mxu0 0
  %1257 = vmatprep.subr.bf16.mxu0 0
  %1258 = vmatpush1.bf16.msra.mxu0 0
  %1259 = vmatprep.subr.bf16.mxu0 0
  %1260 = vmatpush1.bf16.msra.mxu0 0
  %1261 = vmatprep.mubr.bf16.mxu0 0
  %1262 = vmatmul.mubr.bf16.gmra.mrb[0].mxu0 %v1164
  %v1263 = vpop.f32.mrb[0].mxu0
  %v1264 = vadd.f32 0.0, %v1263
  %v1265 = vpop.f32.mrb[0].mxu0
  %v1266 = vpop.f32.mrb[0].mxu0
  %v1267 = vpop.f32.mrb[0].mxu0
  %1268 = vdwg.mxu0
  %v1269 = vadd.f32 %v276, %v1264
  %v1270 = vmul.f32 %v1269, 0.5
  %v1271 = vtanh.pop %v1270
  %v1272 = vmul.f32 %v1271, 0.5
  %v1273 = vadd.f32 %v1272, 0.5
  %v1274 = vmul.f32 %v1273, %v1106
  %1276 = vrot.lane.b32.xlu0 %v1271, 32
  %v1277 = vpop.permute.xlu0 %1276
  %v1279 = vmul.f32 %v1273, %v1277
  %1281 = vrot.lane.b32.xlu0 %v1279, 32
  %v1282 = vpop.permute.xlu0 %1281
  %v1284 = vadd.f32 %v1274, %v1282
  %v1285 = vtanh.pop %v1284
  %1287 = vrot.lane.b32.xlu0 %v1285, 32
  %v1288 = vpop.permute.xlu0 %1287
  %v1290 = vmul.f32 %v1273, %v1288
  %v1291 = vpack.c.bf16 %v1290, %v1290
  %1293 = vrot.lane.b32.xlu0 %v1228, 64
  %v1294 = vpop.permute.xlu0 %1293
  %v1296 = vsel %vm47, %v1294, 0
  %1298 = vmatprep.subr.bf16.mxu0 0
  %1299 = vmatpush1.bf16.msra.mxu0 %v392
  %1300 = vmatprep.subr.bf16.mxu0 0
  %1301 = vmatpush1.bf16.msra.mxu0 %v393
  %1302 = vmatprep.subr.bf16.mxu0 0
  %1303 = vmatpush1.bf16.msra.mxu0 0
  %1304 = vmatprep.subr.bf16.mxu0 0
  %1305 = vmatpush1.bf16.msra.mxu0 0
  %1306 = vmatprep.subr.bf16.mxu0 0
  %1307 = vmatpush1.bf16.msra.mxu0 0
  %1308 = vmatprep.subr.bf16.mxu0 0
  %1309 = vmatpush1.bf16.msra.mxu0 0
  %1310 = vmatprep.subr.bf16.mxu0 0
  %1311 = vmatpush1.bf16.msra.mxu0 0
  %1312 = vmatprep.subr.bf16.mxu0 0
  %1313 = vmatpush1.bf16.msra.mxu0 0
  %1314 = vmatprep.subr.bf16.mxu0 0
  %1315 = vmatpush1.bf16.msra.mxu0 0
  %1316 = vmatprep.subr.bf16.mxu0 0
  %1317 = vmatpush1.bf16.msra.mxu0 0
  %1318 = vmatprep.subr.bf16.mxu0 0
  %1319 = vmatpush1.bf16.msra.mxu0 0
  %1320 = vmatprep.subr.bf16.mxu0 0
  %1321 = vmatpush1.bf16.msra.mxu0 0
  %1322 = vmatprep.subr.bf16.mxu0 0
  %1323 = vmatpush1.bf16.msra.mxu0 0
  %1324 = vmatprep.subr.bf16.mxu0 0
  %1325 = vmatpush1.bf16.msra.mxu0 0
  %1326 = vmatprep.subr.bf16.mxu0 0
  %1327 = vmatpush1.bf16.msra.mxu0 0
  %1328 = vmatprep.subr.bf16.mxu0 0
  %1329 = vmatpush1.bf16.msra.mxu0 0
  %1330 = vmatprep.mubr.bf16.mxu0 0
  %1331 = vmatmul.mubr.bf16.gmra.mrb[0].mxu0 %v1296
  %v1332 = vpop.f32.mrb[0].mxu0
  %v1333 = vadd.f32 0.0, %v1332
  %v1334 = vpop.f32.mrb[0].mxu0
  %v1335 = vpop.f32.mrb[0].mxu0
  %v1336 = vpop.f32.mrb[0].mxu0
  %1337 = vdwg.mxu0
  %1339 = vrot.lane.b32.xlu0 %v1291, 64
  %v1340 = vpop.permute.xlu0 %1339
  %v1342 = vsel %vm47, %v1340, 0
  %1344 = vmatprep.subr.bf16.mxu0 0
  %1345 = vmatpush1.bf16.msra.mxu0 %v447
  %1346 = vmatprep.subr.bf16.mxu0 0
  %1347 = vmatpush1.bf16.msra.mxu0 %v448
  %1348 = vmatprep.subr.bf16.mxu0 0
  %1349 = vmatpush1.bf16.msra.mxu0 0
  %1350 = vmatprep.subr.bf16.mxu0 0
  %1351 = vmatpush1.bf16.msra.mxu0 0
  %1352 = vmatprep.subr.bf16.mxu0 0
  %1353 = vmatpush1.bf16.msra.mxu0 0
  %1354 = vmatprep.subr.bf16.mxu0 0
  %1355 = vmatpush1.bf16.msra.mxu0 0
  %1356 = vmatprep.subr.bf16.mxu0 0
  %1357 = vmatpush1.bf16.msra.mxu0 0
  %1358 = vmatprep.subr.bf16.mxu0 0
  %1359 = vmatpush1.bf16.msra.mxu0 0
  %1360 = vmatprep.subr.bf16.mxu0 0
  %1361 = vmatpush1.bf16.msra.mxu0 0
  %1362 = vmatprep.subr.bf16.mxu0 0
  %1363 = vmatpush1.bf16.msra.mxu0 0
  %1364 = vmatprep.subr.bf16.mxu0 0
  %1365 = vmatpush1.bf16.msra.mxu0 0
  %1366 = vmatprep.subr.bf16.mxu0 0
  %1367 = vmatpush1.bf16.msra.mxu0 0
  %1368 = vmatprep.subr.bf16.mxu0 0
  %1369 = vmatpush1.bf16.msra.mxu0 0
  %1370 = vmatprep.subr.bf16.mxu0 0
  %1371 = vmatpush1.bf16.msra.mxu0 0
  %1372 = vmatprep.subr.bf16.mxu0 0
  %1373 = vmatpush1.bf16.msra.mxu0 0
  %1374 = vmatprep.subr.bf16.mxu0 0
  %1375 = vmatpush1.bf16.msra.mxu0 0
  %1376 = vmatprep.mubr.bf16.mxu0 0
  %1377 = vmatmul.mubr.bf16.gmra.mrb[0].mxu0 %v1342
  %v1378 = vpop.f32.mrb[0].mxu0
  %v1379 = vadd.f32 %v1333, %v1378
  %v1380 = vpop.f32.mrb[0].mxu0
  %v1381 = vpop.f32.mrb[0].mxu0
  %v1382 = vpop.f32.mrb[0].mxu0
  %1383 = vdwg.mxu0
  %v1384 = vadd.f32 %v1379, %v292
  %v1385 = vmul.f32 %v1384, 0.5
  %v1386 = vtanh.pop %v1385
  %v1387 = vmul.f32 %v1386, 0.5
  %v1388 = vadd.f32 %v1387, 0.5
  %v1389 = vmul.f32 %v1388, %v1221
  %1391 = vrot.lane.b32.xlu0 %v1386, 32
  %v1392 = vpop.permute.xlu0 %1391
  %v1394 = vmul.f32 %v1388, %v1392
  %1396 = vrot.lane.b32.xlu0 %v1394, 32
  %v1397 = vpop.permute.xlu0 %1396
  %v1399 = vadd.f32 %v1389, %v1397
  %v1400 = vtanh.pop %v1399
  %1402 = vrot.lane.b32.xlu0 %v1400, 32
  %v1403 = vpop.permute.xlu0 %1402
  %v1405 = vmul.f32 %v1388, %v1403
  %v1406 = vpack.c.bf16 %v1405, %v1405
  %1407 = vmatprep.subr.bf16.mxu0 0
  %1408 = vmatpush1.bf16.msra.mxu0 %v306
  %1409 = vmatprep.subr.bf16.mxu0 0
  %1410 = vmatpush1.bf16.msra.mxu0 %v307
  %1411 = vmatprep.subr.bf16.mxu0 0
  %1412 = vmatpush1.bf16.msra.mxu0 0
  %1413 = vmatprep.subr.bf16.mxu0 0
  %1414 = vmatpush1.bf16.msra.mxu0 0
  %1415 = vmatprep.subr.bf16.mxu0 0
  %1416 = vmatpush1.bf16.msra.mxu0 0
  %1417 = vmatprep.subr.bf16.mxu0 0
  %1418 = vmatpush1.bf16.msra.mxu0 0
  %1419 = vmatprep.subr.bf16.mxu0 0
  %1420 = vmatpush1.bf16.msra.mxu0 0
  %1421 = vmatprep.subr.bf16.mxu0 0
  %1422 = vmatpush1.bf16.msra.mxu0 0
  %1423 = vmatprep.subr.bf16.mxu0 0
  %1424 = vmatpush1.bf16.msra.mxu0 0
  %1425 = vmatprep.subr.bf16.mxu0 0
  %1426 = vmatpush1.bf16.msra.mxu0 0
  %1427 = vmatprep.subr.bf16.mxu0 0
  %1428 = vmatpush1.bf16.msra.mxu0 0
  %1429 = vmatprep.subr.bf16.mxu0 0
  %1430 = vmatpush1.bf16.msra.mxu0 0
  %1431 = vmatprep.subr.bf16.mxu0 0
  %1432 = vmatpush1.bf16.msra.mxu0 0
  %1433 = vmatprep.subr.bf16.mxu0 0
  %1434 = vmatpush1.bf16.msra.mxu0 0
  %1435 = vmatprep.subr.bf16.mxu0 0
  %1436 = vmatpush1.bf16.msra.mxu0 0
  %1437 = vmatprep.subr.bf16.mxu0 0
  %1438 = vmatpush1.bf16.msra.mxu0 0
  %1439 = vmatprep.mubr.bf16.mxu0 0
  %1440 = vmatmul.mubr.bf16.gmra.mrb[0].mxu0 %v1342
  %v1441 = vpop.f32.mrb[0].mxu0
  %v1442 = vadd.f32 0.0, %v1441
  %v1443 = vpop.f32.mrb[0].mxu0
  %v1444 = vpop.f32.mrb[0].mxu0
  %v1445 = vpop.f32.mrb[0].mxu0
  %1446 = vdwg.mxu0
  %v1447 = vadd.f32 %v281, %v1442
  %v1448 = vmul.f32 %v1447, 0.5
  %v1449 = vtanh.pop %v1448
  %v1450 = vmul.f32 %v1449, 0.5
  %v1451 = vadd.f32 %v1450, 0.5
  %v1452 = vmul.f32 %v1451, %v1284
  %1454 = vrot.lane.b32.xlu0 %v1449, 32
  %v1455 = vpop.permute.xlu0 %1454
  %v1457 = vmul.f32 %v1451, %v1455
  %1459 = vrot.lane.b32.xlu0 %v1457, 32
  %v1460 = vpop.permute.xlu0 %1459
  %v1462 = vadd.f32 %v1452, %v1460
  %v1463 = vtanh.pop %v1462
  %1465 = vrot.lane.b32.xlu0 %v1463, 32
  %v1466 = vpop.permute.xlu0 %1465
  %v1468 = vmul.f32 %v1451, %v1466
  %v1469 = vpack.c.bf16 %v1468, %v1468
  %1471 = vrot.lane.b32.xlu0 %v1406, 64
  %v1472 = vpop.permute.xlu0 %1471
  %v1474 = vsel %vm47, %v1472, 0
  %1476 = vmatprep.subr.bf16.mxu0 0
  %1477 = vmatpush1.bf16.msra.mxu0 %v392
  %1478 = vmatprep.subr.bf16.mxu0 0
  %1479 = vmatpush1.bf16.msra.mxu0 %v393
  %1480 = vmatprep.subr.bf16.mxu0 0
  %1481 = vmatpush1.bf16.msra.mxu0 0
  %1482 = vmatprep.subr.bf16.mxu0 0
  %1483 = vmatpush1.bf16.msra.mxu0 0
  %1484 = vmatprep.subr.bf16.mxu0 0
  %1485 = vmatpush1.bf16.msra.mxu0 0
  %1486 = vmatprep.subr.bf16.mxu0 0
  %1487 = vmatpush1.bf16.msra.mxu0 0
  %1488 = vmatprep.subr.bf16.mxu0 0
  %1489 = vmatpush1.bf16.msra.mxu0 0
  %1490 = vmatprep.subr.bf16.mxu0 0
  %1491 = vmatpush1.bf16.msra.mxu0 0
  %1492 = vmatprep.subr.bf16.mxu0 0
  %1493 = vmatpush1.bf16.msra.mxu0 0
  %1494 = vmatprep.subr.bf16.mxu0 0
  %1495 = vmatpush1.bf16.msra.mxu0 0
  %1496 = vmatprep.subr.bf16.mxu0 0
  %1497 = vmatpush1.bf16.msra.mxu0 0
  %1498 = vmatprep.subr.bf16.mxu0 0
  %1499 = vmatpush1.bf16.msra.mxu0 0
  %1500 = vmatprep.subr.bf16.mxu0 0
  %1501 = vmatpush1.bf16.msra.mxu0 0
  %1502 = vmatprep.subr.bf16.mxu0 0
  %1503 = vmatpush1.bf16.msra.mxu0 0
  %1504 = vmatprep.subr.bf16.mxu0 0
  %1505 = vmatpush1.bf16.msra.mxu0 0
  %1506 = vmatprep.subr.bf16.mxu0 0
  %1507 = vmatpush1.bf16.msra.mxu0 0
  %1508 = vmatprep.mubr.bf16.mxu0 0
  %1509 = vmatmul.mubr.bf16.gmra.mrb[0].mxu0 %v1474
  %v1510 = vpop.f32.mrb[0].mxu0
  %v1511 = vadd.f32 0.0, %v1510
  %v1512 = vpop.f32.mrb[0].mxu0
  %v1513 = vpop.f32.mrb[0].mxu0
  %v1514 = vpop.f32.mrb[0].mxu0
  %1515 = vdwg.mxu0
  %1517 = vrot.lane.b32.xlu0 %v1469, 64
  %v1518 = vpop.permute.xlu0 %1517
  %v1520 = vsel %vm47, %v1518, 0
  %1522 = vmatprep.subr.bf16.mxu0 0
  %1523 = vmatpush1.bf16.msra.mxu0 %v447
  %1524 = vmatprep.subr.bf16.mxu0 0
  %1525 = vmatpush1.bf16.msra.mxu0 %v448
  %1526 = vmatprep.subr.bf16.mxu0 0
  %1527 = vmatpush1.bf16.msra.mxu0 0
  %1528 = vmatprep.subr.bf16.mxu0 0
  %1529 = vmatpush1.bf16.msra.mxu0 0
  %1530 = vmatprep.subr.bf16.mxu0 0
  %1531 = vmatpush1.bf16.msra.mxu0 0
  %1532 = vmatprep.subr.bf16.mxu0 0
  %1533 = vmatpush1.bf16.msra.mxu0 0
  %1534 = vmatprep.subr.bf16.mxu0 0
  %1535 = vmatpush1.bf16.msra.mxu0 0
  %1536 = vmatprep.subr.bf16.mxu0 0
  %1537 = vmatpush1.bf16.msra.mxu0 0
  %1538 = vmatprep.subr.bf16.mxu0 0
  %1539 = vmatpush1.bf16.msra.mxu0 0
  %1540 = vmatprep.subr.bf16.mxu0 0
  %1541 = vmatpush1.bf16.msra.mxu0 0
  %1542 = vmatprep.subr.bf16.mxu0 0
  %1543 = vmatpush1.bf16.msra.mxu0 0
  %1544 = vmatprep.subr.bf16.mxu0 0
  %1545 = vmatpush1.bf16.msra.mxu0 0
  %1546 = vmatprep.subr.bf16.mxu0 0
  %1547 = vmatpush1.bf16.msra.mxu0 0
  %1548 = vmatprep.subr.bf16.mxu0 0
  %1549 = vmatpush1.bf16.msra.mxu0 0
  %1550 = vmatprep.subr.bf16.mxu0 0
  %1551 = vmatpush1.bf16.msra.mxu0 0
  %1552 = vmatprep.subr.bf16.mxu0 0
  %1553 = vmatpush1.bf16.msra.mxu0 0
  %1554 = vmatprep.mubr.bf16.mxu0 0
  %1555 = vmatmul.mubr.bf16.gmra.mrb[0].mxu0 %v1520
  %v1556 = vpop.f32.mrb[0].mxu0
  %v1557 = vadd.f32 %v1511, %v1556
  %v1558 = vpop.f32.mrb[0].mxu0
  %v1559 = vpop.f32.mrb[0].mxu0
  %v1560 = vpop.f32.mrb[0].mxu0
  %1561 = vdwg.mxu0
  %v1562 = vadd.f32 %v1557, %v292
  %v1563 = vmul.f32 %v1562, 0.5
  %v1564 = vtanh.pop %v1563
  %v1565 = vmul.f32 %v1564, 0.5
  %v1566 = vadd.f32 %v1565, 0.5
  %v1567 = vmul.f32 %v1566, %v1399
  %1569 = vrot.lane.b32.xlu0 %v1564, 32
  %v1570 = vpop.permute.xlu0 %1569
  %v1572 = vmul.f32 %v1566, %v1570
  %1574 = vrot.lane.b32.xlu0 %v1572, 32
  %v1575 = vpop.permute.xlu0 %1574
  %v1577 = vadd.f32 %v1567, %v1575
  %v1578 = vtanh.pop %v1577
  %1580 = vrot.lane.b32.xlu0 %v1578, 32
  %v1581 = vpop.permute.xlu0 %1580
  %v1583 = vmul.f32 %v1566, %v1581
  %v1584 = vpack.c.bf16 %v1583, %v1583
  %1585 = vmatprep.subr.bf16.mxu0 0
  %1586 = vmatpush1.bf16.msra.mxu0 %v306
  %1587 = vmatprep.subr.bf16.mxu0 0
  %1588 = vmatpush1.bf16.msra.mxu0 %v307
  %1589 = vmatprep.subr.bf16.mxu0 0
  %1590 = vmatpush1.bf16.msra.mxu0 0
  %1591 = vmatprep.subr.bf16.mxu0 0
  %1592 = vmatpush1.bf16.msra.mxu0 0
  %1593 = vmatprep.subr.bf16.mxu0 0
  %1594 = vmatpush1.bf16.msra.mxu0 0
  %1595 = vmatprep.subr.bf16.mxu0 0
  %1596 = vmatpush1.bf16.msra.mxu0 0
  %1597 = vmatprep.subr.bf16.mxu0 0
  %1598 = vmatpush1.bf16.msra.mxu0 0
  %1599 = vmatprep.subr.bf16.mxu0 0
  %1600 = vmatpush1.bf16.msra.mxu0 0
  %1601 = vmatprep.subr.bf16.mxu0 0
  %1602 = vmatpush1.bf16.msra.mxu0 0
  %1603 = vmatprep.subr.bf16.mxu0 0
  %1604 = vmatpush1.bf16.msra.mxu0 0
  %1605 = vmatprep.subr.bf16.mxu0 0
  %1606 = vmatpush1.bf16.msra.mxu0 0
  %1607 = vmatprep.subr.bf16.mxu0 0
  %1608 = vmatpush1.bf16.msra.mxu0 0
  %1609 = vmatprep.subr.bf16.mxu0 0
  %1610 = vmatpush1.bf16.msra.mxu0 0
  %1611 = vmatprep.subr.bf16.mxu0 0
  %1612 = vmatpush1.bf16.msra.mxu0 0
  %1613 = vmatprep.subr.bf16.mxu0 0
  %1614 = vmatpush1.bf16.msra.mxu0 0
  %1615 = vmatprep.subr.bf16.mxu0 0
  %1616 = vmatpush1.bf16.msra.mxu0 0
  %1617 = vmatprep.mubr.bf16.mxu0 0
  %1618 = vmatmul.mubr.bf16.gmra.mrb[0].mxu0 %v1520
  %v1619 = vpop.f32.mrb[0].mxu0
  %v1620 = vadd.f32 0.0, %v1619
  %v1621 = vpop.f32.mrb[0].mxu0
  %v1622 = vpop.f32.mrb[0].mxu0
  %v1623 = vpop.f32.mrb[0].mxu0
  %1624 = vdwg.mxu0
  %v1625 = vadd.f32 %v284, %v1620
  %v1626 = vmul.f32 %v1625, 0.5
  %v1627 = vtanh.pop %v1626
  %v1628 = vmul.f32 %v1627, 0.5
  %v1629 = vadd.f32 %v1628, 0.5
  %v1630 = vmul.f32 %v1629, %v1462
  %1632 = vrot.lane.b32.xlu0 %v1627, 32
  %v1633 = vpop.permute.xlu0 %1632
  %v1635 = vmul.f32 %v1629, %v1633
  %1637 = vrot.lane.b32.xlu0 %v1635, 32
  %v1638 = vpop.permute.xlu0 %1637
  %v1640 = vadd.f32 %v1630, %v1638
  %v1641 = vtanh.pop %v1640
  %1643 = vrot.lane.b32.xlu0 %v1641, 32
  %v1644 = vpop.permute.xlu0 %1643
  %v1646 = vmul.f32 %v1629, %v1644
  %v1647 = vpack.c.bf16 %v1646, %v1646
  %1649 = vrot.lane.b32.xlu0 %v1584, 64
  %v1650 = vpop.permute.xlu0 %1649
  %v1652 = vsel %vm47, %v1650, 0
  %1654 = vmatprep.subr.bf16.mxu0 0
  %1655 = vmatpush1.bf16.msra.mxu0 %v392
  %1656 = vmatprep.subr.bf16.mxu0 0
  %1657 = vmatpush1.bf16.msra.mxu0 %v393
  %1658 = vmatprep.subr.bf16.mxu0 0
  %1659 = vmatpush1.bf16.msra.mxu0 0
  %1660 = vmatprep.subr.bf16.mxu0 0
  %1661 = vmatpush1.bf16.msra.mxu0 0
  %1662 = vmatprep.subr.bf16.mxu0 0
  %1663 = vmatpush1.bf16.msra.mxu0 0
  %1664 = vmatprep.subr.bf16.mxu0 0
  %1665 = vmatpush1.bf16.msra.mxu0 0
  %1666 = vmatprep.subr.bf16.mxu0 0
  %1667 = vmatpush1.bf16.msra.mxu0 0
  %1668 = vmatprep.subr.bf16.mxu0 0
  %1669 = vmatpush1.bf16.msra.mxu0 0
  %1670 = vmatprep.subr.bf16.mxu0 0
  %1671 = vmatpush1.bf16.msra.mxu0 0
  %1672 = vmatprep.subr.bf16.mxu0 0
  %1673 = vmatpush1.bf16.msra.mxu0 0
  %1674 = vmatprep.subr.bf16.mxu0 0
  %1675 = vmatpush1.bf16.msra.mxu0 0
  %1676 = vmatprep.subr.bf16.mxu0 0
  %1677 = vmatpush1.bf16.msra.mxu0 0
  %1678 = vmatprep.subr.bf16.mxu0 0
  %1679 = vmatpush1.bf16.msra.mxu0 0
  %1680 = vmatprep.subr.bf16.mxu0 0
  %1681 = vmatpush1.bf16.msra.mxu0 0
  %1682 = vmatprep.subr.bf16.mxu0 0
  %1683 = vmatpush1.bf16.msra.mxu0 0
  %1684 = vmatprep.subr.bf16.mxu0 0
  %1685 = vmatpush1.bf16.msra.mxu0 0
  %1686 = vmatprep.mubr.bf16.mxu0 0
  %1687 = vmatmul.mubr.bf16.gmra.mrb[0].mxu0 %v1652
  %v1688 = vpop.f32.mrb[0].mxu0
  %v1689 = vadd.f32 0.0, %v1688
  %v1690 = vpop.f32.mrb[0].mxu0
  %v1691 = vpop.f32.mrb[0].mxu0
  %v1692 = vpop.f32.mrb[0].mxu0
  %1693 = vdwg.mxu0
  %1695 = vrot.lane.b32.xlu0 %v1647, 64
  %v1696 = vpop.permute.xlu0 %1695
  %v1698 = vsel %vm47, %v1696, 0
  %1700 = vmatprep.subr.bf16.mxu0 0
  %1701 = vmatpush1.bf16.msra.mxu0 %v447
  %1702 = vmatprep.subr.bf16.mxu0 0
  %1703 = vmatpush1.bf16.msra.mxu0 %v448
  %1704 = vmatprep.subr.bf16.mxu0 0
  %1705 = vmatpush1.bf16.msra.mxu0 0
  %1706 = vmatprep.subr.bf16.mxu0 0
  %1707 = vmatpush1.bf16.msra.mxu0 0
  %1708 = vmatprep.subr.bf16.mxu0 0
  %1709 = vmatpush1.bf16.msra.mxu0 0
  %1710 = vmatprep.subr.bf16.mxu0 0
  %1711 = vmatpush1.bf16.msra.mxu0 0
  %1712 = vmatprep.subr.bf16.mxu0 0
  %1713 = vmatpush1.bf16.msra.mxu0 0
  %1714 = vmatprep.subr.bf16.mxu0 0
  %1715 = vmatpush1.bf16.msra.mxu0 0
  %1716 = vmatprep.subr.bf16.mxu0 0
  %1717 = vmatpush1.bf16.msra.mxu0 0
  %1718 = vmatprep.subr.bf16.mxu0 0
  %1719 = vmatpush1.bf16.msra.mxu0 0
  %1720 = vmatprep.subr.bf16.mxu0 0
  %1721 = vmatpush1.bf16.msra.mxu0 0
  %1722 = vmatprep.subr.bf16.mxu0 0
  %1723 = vmatpush1.bf16.msra.mxu0 0
  %1724 = vmatprep.subr.bf16.mxu0 0
  %1725 = vmatpush1.bf16.msra.mxu0 0
  %1726 = vmatprep.subr.bf16.mxu0 0
  %1727 = vmatpush1.bf16.msra.mxu0 0
  %1728 = vmatprep.subr.bf16.mxu0 0
  %1729 = vmatpush1.bf16.msra.mxu0 0
  %1730 = vmatprep.subr.bf16.mxu0 0
  %1731 = vmatpush1.bf16.msra.mxu0 0
  %1732 = vmatprep.mubr.bf16.mxu0 0
  %1733 = vmatmul.mubr.bf16.gmra.mrb[0].mxu0 %v1698
  %v1734 = vpop.f32.mrb[0].mxu0
  %v1735 = vadd.f32 %v1689, %v1734
  %v1736 = vpop.f32.mrb[0].mxu0
  %v1737 = vpop.f32.mrb[0].mxu0
  %v1738 = vpop.f32.mrb[0].mxu0
  %1739 = vdwg.mxu0
  %v1740 = vadd.f32 %v1735, %v292
  %v1741 = vmul.f32 %v1740, 0.5
  %v1742 = vtanh.pop %v1741
  %v1743 = vmul.f32 %v1742, 0.5
  %v1744 = vadd.f32 %v1743, 0.5
  %v1745 = vmul.f32 %v1744, %v1577
  %1747 = vrot.lane.b32.xlu0 %v1742, 32
  %v1748 = vpop.permute.xlu0 %1747
  %v1750 = vmul.f32 %v1744, %v1748
  %1752 = vrot.lane.b32.xlu0 %v1750, 32
  %v1753 = vpop.permute.xlu0 %1752
  %v1755 = vadd.f32 %v1745, %v1753
  %v1756 = vtanh.pop %v1755
  %1758 = vrot.lane.b32.xlu0 %v1756, 32
  %v1759 = vpop.permute.xlu0 %1758
  %v1761 = vmul.f32 %v1744, %v1759
  %v1762 = vpack.c.bf16 %v1761, %v1761
  %v1763 = vmax.bf16 %v1762, 0
  %v1764 = vld [vmem:[%s9] sm:$0xf]
  %v1765 = vld [vmem:[%s9 + $0x4] sm:$0xf]
  %v1766 = vld [vmem:[%s9 + $0x8] sm:$0xf]
  %v1767 = vld [vmem:[%s9 + $0xc] sm:$0xf]
  %v1768 = vld [vmem:[%s10] sm:$0x1]
  %v1770 = vlaneseq
  %v1771 = vshrl.u32 %v1770, 7
  %v1772 = vsub.s32 0, %v1771
  %v1773 = vrot.slane %v1768, %v1772
  %1776 = vrot.lane.b32.xlu0 %v1763, 64
  %v1777 = vpop.permute.xlu0 %1776
  %v1782 = vunpack.c.l.b16 %v1764
  %v1783 = vunpack.c.l.b16 %v1765
  %v1784 = vunpack.c.l.b16 %v1766
  %v1785 = vunpack.c.l.b16 %v1767
  %v1786 = vpack.c.b16 %v1783, %v1782
  %v1787 = vpack.c.b16 %v1785, %v1784
  %v1791 = vsel %vm47, %v1777, 0
  %1793 = vmatprep.subr.bf16.mxu0 0
  %1794 = vmatpush1.bf16.msra.mxu0 %v1786
  %1795 = vmatprep.subr.bf16.mxu0 0
  %1796 = vmatpush1.bf16.msra.mxu0 %v1787
  %1797 = vmatprep.subr.bf16.mxu0 0
  %1798 = vmatpush1.bf16.msra.mxu0 0
  %1799 = vmatprep.subr.bf16.mxu0 0
  %1800 = vmatpush1.bf16.msra.mxu0 0
  %1801 = vmatprep.subr.bf16.mxu0 0
  %1802 = vmatpush1.bf16.msra.mxu0 0
  %1803 = vmatprep.subr.bf16.mxu0 0
  %1804 = vmatpush1.bf16.msra.mxu0 0
  %1805 = vmatprep.subr.bf16.mxu0 0
  %1806 = vmatpush1.bf16.msra.mxu0 0
  %1807 = vmatprep.subr.bf16.mxu0 0
  %1808 = vmatpush1.bf16.msra.mxu0 0
  %1809 = vmatprep.subr.bf16.mxu0 0
  %1810 = vmatpush1.bf16.msra.mxu0 0
  %1811 = vmatprep.subr.bf16.mxu0 0
  %1812 = vmatpush1.bf16.msra.mxu0 0
  %1813 = vmatprep.subr.bf16.mxu0 0
  %1814 = vmatpush1.bf16.msra.mxu0 0
  %1815 = vmatprep.subr.bf16.mxu0 0
  %1816 = vmatpush1.bf16.msra.mxu0 0
  %1817 = vmatprep.subr.bf16.mxu0 0
  %1818 = vmatpush1.bf16.msra.mxu0 0
  %1819 = vmatprep.subr.bf16.mxu0 0
  %1820 = vmatpush1.bf16.msra.mxu0 0
  %1821 = vmatprep.subr.bf16.mxu0 0
  %1822 = vmatpush1.bf16.msra.mxu0 0
  %1823 = vmatprep.subr.bf16.mxu0 0
  %1824 = vmatpush1.bf16.msra.mxu0 0
  %1825 = vmatprep.mubr.bf16.mxu0 0
  %1826 = vmatmul.mubr.bf16.gmra.mrb[0].mxu0 %v1791
  %v1827 = vpop.f32.mrb[0].mxu0
  %v1828 = vadd.f32 %v1773, %v1827
  %v1829 = vpop.f32.mrb[0].mxu0
  %v1830 = vpop.f32.mrb[0].mxu0
  %v1831 = vpop.f32.mrb[0].mxu0
  %1832 = vdwg.mxu0
  %1833 = vst [vmem:[%s11] sm:$0xff] %v1828
  // Predicated region
  $region46: #{lstm_forward.1} parent=0 // pred_check
    _
  $region47: #{lstm_forward.1} parent=0 // pred_check_branch
    %1835 = sbr.rel (0) target = $region49
  $region48: #{lstm_forward.1} parent=0 // pred_region
    _
  $region49: #{lstm_forward.1} parent=0 // pred_fallthru
    _
  // Predicated region
  $region50: #{lstm_forward.1} parent=0 // pred_check
    _
  $region51: #{lstm_forward.1} parent=0 // pred_check_branch
    %1837 = sbr.rel (0) target = $region53
  $region52: #{lstm_forward.1} parent=0 // pred_region
    _
  $region53: #{lstm_forward.1} parent=0 // pred_fallthru
    _

</llo_original>
